<compile_context>
chip_gen: v5e
topology: v5e:2x2
jax: 0.10.0
libtpu: 0.0.40
codegen_flags: <defaults>
</compile_context>

<pallas_src>
import jax
import jax.numpy as jnp
from jax.experimental import pallas as pl
from jax.experimental.pallas import tpu as pltpu


def _round_up(x, m):
    return ((x + m - 1) // m) * m


def _pad_gate_dim(w, h, hp):
    """Pad trailing 4*h gate axis to 4*hp, preserving PyTorch (i,f,g,o) blocks."""
    if h == hp:
        return w
    out = jnp.zeros(w.shape[:-1] + (4 * hp,), w.dtype)
    for g in range(4):
        out = out.at[..., g * hp: g * hp + h].set(w[..., g * h:(g + 1) * h])
    return out


def _vmem_capacity_bytes():
    try:
        return int(pltpu.get_tpu_info().vmem_capacity_bytes)
    except Exception:
        return 64 << 20          # conservative fallback: v7x per-TensorCore VMEM


def _tensorcores_per_chip():
    try:
        kind = jax.devices()[0].device_kind.lower()
    except Exception:
        return 1
    return 2 if "v7" in kind else 1   # v7x: 2 TCs/chip; v5e/v6e: 1


def lstm_estimator_kernel(gx_ref, whh_ref, wpost_ref, bpost_ref, out_ref,
                          hseq_scr, h_scr, c_scr):
    TT, TB, _ = gx_ref.shape
    HP = whh_ref.shape[0]          # padded hidden dim (multiple of 128)
    SP = wpost_ref.shape[1]        # padded output dim (multiple of 128)

    # New batch tile => time axis restarts at chunk 0: reset recurrent state.
    @pl.when(pl.program_id(1) == 0)
    def _():
        h_scr[...] = jnp.zeros(h_scr.shape, h_scr.dtype)
        c_scr[...] = jnp.zeros(c_scr.shape, c_scr.dtype)

    # ---- LSTM recurrence over this time chunk (f32, PyTorch gate order) ----
    def step(t, carry):
        # x-side pre-activations (biases already folded in) + h @ W_hh (f32).
        gates = gx_ref[t] + jnp.dot(h_scr[...], whh_ref[...],
                                    preferred_element_type=jnp.float32)
        # HP is a multiple of 128, so every gate slice is lane-aligned.
        i_g = jax.nn.sigmoid(gates[:, 0 * HP:1 * HP])
        f_g = jax.nn.sigmoid(gates[:, 1 * HP:2 * HP])
        g_g = jnp.tanh(gates[:, 2 * HP:3 * HP])
        o_g = jax.nn.sigmoid(gates[:, 3 * HP:4 * HP])
        c_new = f_g * c_scr[...] + i_g * g_g
        h_new = o_g * jnp.tanh(c_new)
        h_scr[...] = h_new
        c_scr[...] = c_new
        off = pl.multiple_of(t * TB, TB)
        hseq_scr[pl.ds(off, TB), :] = h_new
        return carry

    jax.lax.fori_loop(0, TT, step, None, unroll=True if TT <= 16 else 8)

    # ---- post Linear for this chunk: bf16 operands on the MXU, f32 acc ----
    # (hseq kept f32 for aligned sublane stores; cast right at the dot.)
    out2d = (jnp.dot(hseq_scr[...].astype(jnp.bfloat16), wpost_ref[...],
                     preferred_element_type=jnp.float32)
             + bpost_ref[...])                                  # (TT*TB, SP)
    out_ref[...] = out2d.reshape(TT, TB, SP).astype(out_ref.dtype)


def lstm_estimator_forward(x, params, *, num_batch_tiles=None, time_chunk=None):
    B, T, D = x.shape
    H = params['w_hh'].shape[0]
    S = params['w_post'].shape[1]

    HP = _round_up(H, 128)
    SP = _round_up(S, 128)
    G4 = 4 * HP

    # --- per-generation tiling ------------------------------------------------
    vmem_limit = int(_vmem_capacity_bytes() * 0.85)        # 15% headroom
    if num_batch_tiles is None:
        num_batch_tiles = _tensorcores_per_chip()           # 1 on v5e/v6e, 2 on v7x
    B8 = _round_up(B, 8)
    TB = _round_up(pl.cdiv(B8, num_batch_tiles), 8)
    TB = min(TB, 512)                                       # keep vreg/VMEM pressure sane
    BP = _round_up(B8, TB)

    if time_chunk is None:
        # Size the time chunk against the VMEM budget: resident weights +
        # carried h/c scratch + double-buffered gx/out blocks + chunk hseq.
        fixed = (HP * G4 * 4 + HP * SP * 2 + SP * 4) + 2 * TB * HP * 4
        per_t = TB * (2 * G4 * 4 + 2 * SP * 4 + HP * 4)
        time_chunk = max(1, min(T, 256, (int(vmem_limit * 0.9) - fixed) // per_t))
    TT = int(time_chunk)
    TP = _round_up(T, TT)

    # --- fold pre-Linear into the LSTM input projection; run it in XLA --------
    w_fused = params['w_pre'] @ params['w_ih']                               # (D, 4H)
    b_fused = params['b_pre'] @ params['w_ih'] + params['b_ih'] + params['b_hh']
    wf_p = _pad_gate_dim(w_fused, H, HP)                                     # (D, 4*HP)
    bf_p = _pad_gate_dim(b_fused, H, HP)                                     # (1, 4*HP)

    x_tm = jnp.swapaxes(x, 0, 1).astype(jnp.float32)                         # (T, B, D)
    gx = jnp.einsum('tbd,dg->tbg', x_tm, wf_p) + bf_p                        # (T, B, 4*HP)
    gx = jnp.pad(gx, ((0, TP - T), (0, BP - B), (0, 0)))                     # (TP, BP, 4*HP)

    whh_p = _pad_gate_dim(
        jnp.pad(params['w_hh'], ((0, HP - H), (0, 0))), H, HP)               # (HP, 4*HP) f32
    wpost_p = jnp.pad(params['w_post'],
                      ((0, HP - H), (0, SP - S))).astype(jnp.bfloat16)       # (HP, SP) bf16
    bpost_p = jnp.pad(params['b_post'], ((0, 0), (0, SP - S)))               # (1, SP)  f32

    resident = pl.BlockSpec(memory_space=pltpu.MemorySpace.VMEM)
    kernel = pl.pallas_call(
        lstm_estimator_kernel,
        out_shape=jax.ShapeDtypeStruct((TP, BP, SP), jnp.float32),
        grid_spec=pltpu.PrefetchScalarGridSpec(
            num_scalar_prefetch=0,
            grid=(BP // TB, TP // TT),
            in_specs=[
                pl.BlockSpec((TT, TB, G4), lambda i, j: (j, i, 0)),  # gx time chunk
                resident,   # W_hh   (HP, 4*HP) f32
                resident,   # W_post (HP, SP)   bf16
                resident,   # b_post (1, SP)    f32
            ],
            out_specs=pl.BlockSpec((TT, TB, SP), lambda i, j: (j, i, 0)),
            scratch_shapes=[
                pltpu.VMEM((TT * TB, HP), jnp.float32),  # hidden seq (chunk-local)
                pltpu.VMEM((TB, HP), jnp.float32),       # h state (carried over time)
                pltpu.VMEM((TB, HP), jnp.float32),       # c state (carried over time)
            ]),
        compiler_params=pltpu.CompilerParams(
            dimension_semantics=("parallel", "arbitrary"),
            vmem_limit_bytes=vmem_limit),
    )
    out = kernel(gx, whh_p, wpost_p, bpost_p)                                # (TP, BP, SP)
    return jnp.swapaxes(out, 0, 1)[:B, :T, :S]                               # (B, T, S)


def init_params(key, input_dim, feature_dim, hidden_dim, output_dim):
    """Deterministic synthetic parameters matching PyTorch layer shapes
    (stored pre-transposed as (in, out); biases as (1, out))."""
    ks = jax.random.split(key, 9)

    def uni(k, shape, fan_in):
        bound = 1.0 / jnp.sqrt(jnp.float32(fan_in))
        return jax.random.uniform(k, shape, jnp.float32, -bound, bound)

    return {
        # pre_module: nn.Linear(input_dim, feature_dim)
        'w_pre':  uni(ks[0], (input_dim, feature_dim), input_dim),
        'b_pre':  uni(ks[1], (1, feature_dim), input_dim),
        # nn.LSTM(feature_dim, hidden_dim): weight_ih (4H, F)^T, weight_hh (4H, H)^T
        'w_ih':   uni(ks[2], (feature_dim, 4 * hidden_dim), hidden_dim),
        'w_hh':   uni(ks[3], (hidden_dim, 4 * hidden_dim), hidden_dim),
        'b_ih':   uni(ks[4], (1, 4 * hidden_dim), hidden_dim),
        'b_hh':   uni(ks[5], (1, 4 * hidden_dim), hidden_dim),
        # post_module: nn.Linear(hidden_dim, output_dim)
        'w_post': uni(ks[6], (hidden_dim, output_dim), hidden_dim),
        'b_post': uni(ks[7], (1, output_dim), hidden_dim),
    }


def lstm_estimator_ref(x, p):
    """Pure-JAX reference (unfused, unpadded) for correctness checking."""
    B, T, _ = x.shape
    H = p['w_hh'].shape[0]
    xf = jnp.einsum('btd,df->btf', x, p['w_pre']) + p['b_pre']

    def step(carry, x_t):
        h, c = carry
        gates = x_t @ p['w_ih'] + h @ p['w_hh'] + p['b_ih'] + p['b_hh']
        i_g = jax.nn.sigmoid(gates[:, 0:H])
        f_g = jax.nn.sigmoid(gates[:, H:2 * H])
        g_g = jnp.tanh(gates[:, 2 * H:3 * H])
        o_g = jax.nn.sigmoid(gates[:, 3 * H:4 * H])
        c_new = f_g * c + i_g * g_g
        h_new = o_g * jnp.tanh(c_new)
        return (h_new, c_new), h_new

    h0 = jnp.zeros((B, H), jnp.float32)
    c0 = jnp.zeros((B, H), jnp.float32)
    _, h_seq = jax.lax.scan(step, (h0, c0), jnp.swapaxes(xf, 0, 1))      # (T, B, H)
    h_seq = jnp.swapaxes(h_seq, 0, 1)                                    # (B, T, H)
    return jnp.einsum('bth,hs->bts', h_seq, p['w_post']) + p['b_post']


if __name__ == "__main__":
    B, T = 2, 8
    INPUT_DIM, FEATURE_DIM, HIDDEN_DIM, OUTPUT_DIM = 3, 32, 32, 2

    key = jax.random.PRNGKey(0)
    k_x, k_p = jax.random.split(key)
    x = jax.random.normal(k_x, (B, T, INPUT_DIM), jnp.float32)
    params = init_params(k_p, INPUT_DIM, FEATURE_DIM, HIDDEN_DIM, OUTPUT_DIM)

    out = lstm_estimator_forward(x, params)
    out = jax.block_until_ready(out)

    ref = lstm_estimator_ref(x, params)
    assert out.shape == (B, T, OUTPUT_DIM)
    # bf16 post-projection operands bound the output rounding at ~1e-3;
    # the recurrence itself is kept in f32.
    assert jnp.allclose(out, ref, atol=1e-2, rtol=1e-2)

    print("KERNEL_OK")
</pallas_src>

<mosaic_0001>
module attributes {stable_mosaic.version = 11 : i64} {
  func.func @lstm_estimator_kernel(%arg0: i32, %arg1: i32, %arg2: memref<8x8x512xf32, #tpu.memory_space<vmem>>, %arg3: memref<128x512xf32, #tpu.memory_space<vmem>>, %arg4: memref<128x128xbf16, #tpu.memory_space<vmem>>, %arg5: memref<1x128xf32, #tpu.memory_space<vmem>>, %arg6: memref<8x8x128xf32, #tpu.memory_space<vmem>>, %arg7: memref<64x128xf32, #tpu.memory_space<vmem>>, %arg8: memref<8x128xf32, #tpu.memory_space<vmem>>, %arg9: memref<8x128xf32, #tpu.memory_space<vmem>>) attributes {dimension_semantics = [#tpu.dimension_semantics<parallel>, #tpu.dimension_semantics<arbitrary>], iteration_bounds = array<i64: 1, 1>, scalar_prefetch = 0 : i64, scratch_operands = 3 : i64, tpu.core_type = #tpu.core_type<tc>, window_params = [{transform_indices = @transform_0, window_bounds = array<i64: 8, 8, 512>}, {pipeline_mode = #tpu.pipeline_mode<synchronous>, transform_indices = @transform_1, window_bounds = array<i64: 128, 512>}, {pipeline_mode = #tpu.pipeline_mode<synchronous>, transform_indices = @transform_2, window_bounds = array<i64: 128, 128>}, {pipeline_mode = #tpu.pipeline_mode<synchronous>, transform_indices = @transform_3, window_bounds = array<i64: 1, 128>}, {transform_indices = @transform_4, window_bounds = array<i64: 8, 8, 128>}]} {
    %c0_i32 = arith.constant 0 : i32
    %0 = arith.cmpi eq, %arg1, %c0_i32 : i32
    %1 = arith.extui %0 : i1 to i32
    %c0_i32_0 = arith.constant 0 : i32
    %2 = arith.cmpi ne, %1, %c0_i32_0 : i32
    scf.if %2 {
      %cst_154 = arith.constant 0.000000e+00 : f32
      %324 = vector.broadcast %cst_154 : f32 to vector<8x128xf32>
      %c0_155 = arith.constant 0 : index
      %c0_156 = arith.constant 0 : index
      %325 = vector.load %arg8[%c0_155, %c0_156] : memref<8x128xf32, #tpu.memory_space<vmem>>, vector<8x128xf32>
      tpu.vector_store %arg8[%c0_155, %c0_156], %324 {strides = array<i32>} : memref<8x128xf32, #tpu.memory_space<vmem>>, vector<8x128xf32>,
      %cst_157 = arith.constant 0.000000e+00 : f32
      %326 = vector.broadcast %cst_157 : f32 to vector<8x128xf32>
      %c0_158 = arith.constant 0 : index
      %c0_159 = arith.constant 0 : index
      %327 = vector.load %arg9[%c0_158, %c0_159] : memref<8x128xf32, #tpu.memory_space<vmem>>, vector<8x128xf32>
      tpu.vector_store %arg9[%c0_158, %c0_159], %326 {strides = array<i32>} : memref<8x128xf32, #tpu.memory_space<vmem>>, vector<8x128xf32>,
    } else {
    }
    %c0_i32_1 = arith.constant 0 : i32
    %3 = arith.index_cast %c0_i32_1 : i32 to index
    %c0 = arith.constant 0 : index
    %c0_2 = arith.constant 0 : index
    %4 = vector.load %arg2[%3, %c0, %c0_2] : memref<8x8x512xf32, #tpu.memory_space<vmem>>, vector<1x8x512xf32>
    %5 = vector.shape_cast %4 : vector<1x8x512xf32> to vector<8x512xf32>
    %c0_3 = arith.constant 0 : index
    %c0_4 = arith.constant 0 : index
    %6 = vector.load %arg8[%c0_3, %c0_4] : memref<8x128xf32, #tpu.memory_space<vmem>>, vector<8x128xf32>
    %c0_5 = arith.constant 0 : index
    %c0_6 = arith.constant 0 : index
    %7 = vector.load %arg3[%c0_5, %c0_6] : memref<128x512xf32, #tpu.memory_space<vmem>>, vector<128x512xf32>
    %cst = arith.constant dense<0.000000e+00> : vector<8x512xf32>
    %8 = tpu.matmul %6, %7, %cst {dimension_numbers = #tpu.dot_dimension_numbers<[1], [0], [0], [1], [0, 0, 1, 1], [], []>} : vector<8x128xf32>, vector<128x512xf32>, vector<8x512xf32> -> vector<8x512xf32>
    %9 = arith.addf %5, %8 : vector<8x512xf32>
    %10 = vector.extract_strided_slice %9 {offsets = [0, 0], sizes = [8, 128], strides = [1, 1]} : vector<8x512xf32> to vector<8x128xf32>
    %11 = arith.negf %10 : vector<8x128xf32>
    %12 = math.exp %11 : vector<8x128xf32>
    %cst_7 = arith.constant 1.000000e+00 : f32
    %13 = vector.broadcast %cst_7 : f32 to vector<8x128xf32>
    %14 = arith.addf %13, %12 : vector<8x128xf32>
    %15 = arith.divf %13, %14 : vector<8x128xf32>
    %16 = vector.extract_strided_slice %9 {offsets = [0, 128], sizes = [8, 128], strides = [1, 1]} : vector<8x512xf32> to vector<8x128xf32>
    %17 = arith.negf %16 : vector<8x128xf32>
    %18 = math.exp %17 : vector<8x128xf32>
    %cst_8 = arith.constant 1.000000e+00 : f32
    %19 = vector.broadcast %cst_8 : f32 to vector<8x128xf32>
    %20 = arith.addf %19, %18 : vector<8x128xf32>
    %21 = arith.divf %19, %20 : vector<8x128xf32>
    %22 = vector.extract_strided_slice %9 {offsets = [0, 256], sizes = [8, 128], strides = [1, 1]} : vector<8x512xf32> to vector<8x128xf32>
    %23 = math.tanh %22 : vector<8x128xf32>
    %24 = vector.extract_strided_slice %9 {offsets = [0, 384], sizes = [8, 128], strides = [1, 1]} : vector<8x512xf32> to vector<8x128xf32>
    %25 = arith.negf %24 : vector<8x128xf32>
    %26 = math.exp %25 : vector<8x128xf32>
    %cst_9 = arith.constant 1.000000e+00 : f32
    %27 = vector.broadcast %cst_9 : f32 to vector<8x128xf32>
    %28 = arith.addf %27, %26 : vector<8x128xf32>
    %29 = arith.divf %27, %28 : vector<8x128xf32>
    %c0_10 = arith.constant 0 : index
    %c0_11 = arith.constant 0 : index
    %30 = vector.load %arg9[%c0_10, %c0_11] : memref<8x128xf32, #tpu.memory_space<vmem>>, vector<8x128xf32>
    %31 = arith.mulf %21, %30 : vector<8x128xf32>
    %32 = arith.mulf %15, %23 : vector<8x128xf32>
    %33 = arith.addf %31, %32 : vector<8x128xf32>
    %34 = math.tanh %33 : vector<8x128xf32>
    %35 = arith.mulf %29, %34 : vector<8x128xf32>
    %c0_12 = arith.constant 0 : index
    %c0_13 = arith.constant 0 : index
    %36 = vector.load %arg8[%c0_12, %c0_13] : memref<8x128xf32, #tpu.memory_space<vmem>>, vector<8x128xf32>
    tpu.vector_store %arg8[%c0_12, %c0_13], %35 {strides = array<i32>} : memref<8x128xf32, #tpu.memory_space<vmem>>, vector<8x128xf32>,
    %c0_14 = arith.constant 0 : index
    %c0_15 = arith.constant 0 : index
    %37 = vector.load %arg9[%c0_14, %c0_15] : memref<8x128xf32, #tpu.memory_space<vmem>>, vector<8x128xf32>
    tpu.vector_store %arg9[%c0_14, %c0_15], %33 {strides = array<i32>} : memref<8x128xf32, #tpu.memory_space<vmem>>, vector<8x128xf32>,
    %c8_i32 = arith.constant 8 : i32
    %38 = arith.muli %c0_i32_1, %c8_i32 : i32
    %39 = tpu.assume_multiple %38, 8 : i32
    %40 = arith.index_cast %39 : i32 to index
    %c0_16 = arith.constant 0 : index
    %41 = vector.load %arg7[%40, %c0_16] : memref<64x128xf32, #tpu.memory_space<vmem>>, vector<8x128xf32>
    tpu.vector_store %arg7[%40, %c0_16], %35 {strides = array<i32>} : memref<64x128xf32, #tpu.memory_space<vmem>>, vector<8x128xf32>,
    %c1_i32 = arith.constant 1 : i32
    %42 = arith.index_cast %c1_i32 : i32 to index
    %c0_17 = arith.constant 0 : index
    %c0_18 = arith.constant 0 : index
    %43 = vector.load %arg2[%42, %c0_17, %c0_18] : memref<8x8x512xf32, #tpu.memory_space<vmem>>, vector<1x8x512xf32>
    %44 = vector.shape_cast %43 : vector<1x8x512xf32> to vector<8x512xf32>
    %c0_19 = arith.constant 0 : index
    %c0_20 = arith.constant 0 : index
    %45 = vector.load %arg8[%c0_19, %c0_20] : memref<8x128xf32, #tpu.memory_space<vmem>>, vector<8x128xf32>
    %c0_21 = arith.constant 0 : index
    %c0_22 = arith.constant 0 : index
    %46 = vector.load %arg3[%c0_21, %c0_22] : memref<128x512xf32, #tpu.memory_space<vmem>>, vector<128x512xf32>
    %cst_23 = arith.constant dense<0.000000e+00> : vector<8x512xf32>
    %47 = tpu.matmul %45, %46, %cst_23 {dimension_numbers = #tpu.dot_dimension_numbers<[1], [0], [0], [1], [0, 0, 1, 1], [], []>} : vector<8x128xf32>, vector<128x512xf32>, vector<8x512xf32> -> vector<8x512xf32>
    %48 = arith.addf %44, %47 : vector<8x512xf32>
    %49 = vector.extract_strided_slice %48 {offsets = [0, 0], sizes = [8, 128], strides = [1, 1]} : vector<8x512xf32> to vector<8x128xf32>
    %50 = arith.negf %49 : vector<8x128xf32>
    %51 = math.exp %50 : vector<8x128xf32>
    %cst_24 = arith.constant 1.000000e+00 : f32
    %52 = vector.broadcast %cst_24 : f32 to vector<8x128xf32>
    %53 = arith.addf %52, %51 : vector<8x128xf32>
    %54 = arith.divf %52, %53 : vector<8x128xf32>
    %55 = vector.extract_strided_slice %48 {offsets = [0, 128], sizes = [8, 128], strides = [1, 1]} : vector<8x512xf32> to vector<8x128xf32>
    %56 = arith.negf %55 : vector<8x128xf32>
    %57 = math.exp %56 : vector<8x128xf32>
    %cst_25 = arith.constant 1.000000e+00 : f32
    %58 = vector.broadcast %cst_25 : f32 to vector<8x128xf32>
    %59 = arith.addf %58, %57 : vector<8x128xf32>
    %60 = arith.divf %58, %59 : vector<8x128xf32>
    %61 = vector.extract_strided_slice %48 {offsets = [0, 256], sizes = [8, 128], strides = [1, 1]} : vector<8x512xf32> to vector<8x128xf32>
    %62 = math.tanh %61 : vector<8x128xf32>
    %63 = vector.extract_strided_slice %48 {offsets = [0, 384], sizes = [8, 128], strides = [1, 1]} : vector<8x512xf32> to vector<8x128xf32>
    %64 = arith.negf %63 : vector<8x128xf32>
    %65 = math.exp %64 : vector<8x128xf32>
    %cst_26 = arith.constant 1.000000e+00 : f32
    %66 = vector.broadcast %cst_26 : f32 to vector<8x128xf32>
    %67 = arith.addf %66, %65 : vector<8x128xf32>
    %68 = arith.divf %66, %67 : vector<8x128xf32>
    %c0_27 = arith.constant 0 : index
    %c0_28 = arith.constant 0 : index
    %69 = vector.load %arg9[%c0_27, %c0_28] : memref<8x128xf32, #tpu.memory_space<vmem>>, vector<8x128xf32>
    %70 = arith.mulf %60, %69 : vector<8x128xf32>
    %71 = arith.mulf %54, %62 : vector<8x128xf32>
    %72 = arith.addf %70, %71 : vector<8x128xf32>
    %73 = math.tanh %72 : vector<8x128xf32>
    %74 = arith.mulf %68, %73 : vector<8x128xf32>
    %c0_29 = arith.constant 0 : index
    %c0_30 = arith.constant 0 : index
    %75 = vector.load %arg8[%c0_29, %c0_30] : memref<8x128xf32, #tpu.memory_space<vmem>>, vector<8x128xf32>
    tpu.vector_store %arg8[%c0_29, %c0_30], %74 {strides = array<i32>} : memref<8x128xf32, #tpu.memory_space<vmem>>, vector<8x128xf32>,
    %c0_31 = arith.constant 0 : index
    %c0_32 = arith.constant 0 : index
    %76 = vector.load %arg9[%c0_31, %c0_32] : memref<8x128xf32, #tpu.memory_space<vmem>>, vector<8x128xf32>
    tpu.vector_store %arg9[%c0_31, %c0_32], %72 {strides = array<i32>} : memref<8x128xf32, #tpu.memory_space<vmem>>, vector<8x128xf32>,
    %c8_i32_33 = arith.constant 8 : i32
    %77 = arith.muli %c1_i32, %c8_i32_33 : i32
    %78 = tpu.assume_multiple %77, 8 : i32
    %79 = arith.index_cast %78 : i32 to index
    %c0_34 = arith.constant 0 : index
    %80 = vector.load %arg7[%79, %c0_34] : memref<64x128xf32, #tpu.memory_space<vmem>>, vector<8x128xf32>
    tpu.vector_store %arg7[%79, %c0_34], %74 {strides = array<i32>} : memref<64x128xf32, #tpu.memory_space<vmem>>, vector<8x128xf32>,
    %c2_i32 = arith.constant 2 : i32
    %81 = arith.index_cast %c2_i32 : i32 to index
    %c0_35 = arith.constant 0 : index
    %c0_36 = arith.constant 0 : index
    %82 = vector.load %arg2[%81, %c0_35, %c0_36] : memref<8x8x512xf32, #tpu.memory_space<vmem>>, vector<1x8x512xf32>
    %83 = vector.shape_cast %82 : vector<1x8x512xf32> to vector<8x512xf32>
    %c0_37 = arith.constant 0 : index
    %c0_38 = arith.constant 0 : index
    %84 = vector.load %arg8[%c0_37, %c0_38] : memref<8x128xf32, #tpu.memory_space<vmem>>, vector<8x128xf32>
    %c0_39 = arith.constant 0 : index
    %c0_40 = arith.constant 0 : index
    %85 = vector.load %arg3[%c0_39, %c0_40] : memref<128x512xf32, #tpu.memory_space<vmem>>, vector<128x512xf32>
    %cst_41 = arith.constant dense<0.000000e+00> : vector<8x512xf32>
    %86 = tpu.matmul %84, %85, %cst_41 {dimension_numbers = #tpu.dot_dimension_numbers<[1], [0], [0], [1], [0, 0, 1, 1], [], []>} : vector<8x128xf32>, vector<128x512xf32>, vector<8x512xf32> -> vector<8x512xf32>
    %87 = arith.addf %83, %86 : vector<8x512xf32>
    %88 = vector.extract_strided_slice %87 {offsets = [0, 0], sizes = [8, 128], strides = [1, 1]} : vector<8x512xf32> to vector<8x128xf32>
    %89 = arith.negf %88 : vector<8x128xf32>
    %90 = math.exp %89 : vector<8x128xf32>
    %cst_42 = arith.constant 1.000000e+00 : f32
    %91 = vector.broadcast %cst_42 : f32 to vector<8x128xf32>
    %92 = arith.addf %91, %90 : vector<8x128xf32>
    %93 = arith.divf %91, %92 : vector<8x128xf32>
    %94 = vector.extract_strided_slice %87 {offsets = [0, 128], sizes = [8, 128], strides = [1, 1]} : vector<8x512xf32> to vector<8x128xf32>
    %95 = arith.negf %94 : vector<8x128xf32>
    %96 = math.exp %95 : vector<8x128xf32>
    %cst_43 = arith.constant 1.000000e+00 : f32
    %97 = vector.broadcast %cst_43 : f32 to vector<8x128xf32>
    %98 = arith.addf %97, %96 : vector<8x128xf32>
    %99 = arith.divf %97, %98 : vector<8x128xf32>
    %100 = vector.extract_strided_slice %87 {offsets = [0, 256], sizes = [8, 128], strides = [1, 1]} : vector<8x512xf32> to vector<8x128xf32>
    %101 = math.tanh %100 : vector<8x128xf32>
    %102 = vector.extract_strided_slice %87 {offsets = [0, 384], sizes = [8, 128], strides = [1, 1]} : vector<8x512xf32> to vector<8x128xf32>
    %103 = arith.negf %102 : vector<8x128xf32>
    %104 = math.exp %103 : vector<8x128xf32>
    %cst_44 = arith.constant 1.000000e+00 : f32
    %105 = vector.broadcast %cst_44 : f32 to vector<8x128xf32>
    %106 = arith.addf %105, %104 : vector<8x128xf32>
    %107 = arith.divf %105, %106 : vector<8x128xf32>
    %c0_45 = arith.constant 0 : index
    %c0_46 = arith.constant 0 : index
    %108 = vector.load %arg9[%c0_45, %c0_46] : memref<8x128xf32, #tpu.memory_space<vmem>>, vector<8x128xf32>
    %109 = arith.mulf %99, %108 : vector<8x128xf32>
    %110 = arith.mulf %93, %101 : vector<8x128xf32>
    %111 = arith.addf %109, %110 : vector<8x128xf32>
    %112 = math.tanh %111 : vector<8x128xf32>
    %113 = arith.mulf %107, %112 : vector<8x128xf32>
    %c0_47 = arith.constant 0 : index
    %c0_48 = arith.constant 0 : index
    %114 = vector.load %arg8[%c0_47, %c0_48] : memref<8x128xf32, #tpu.memory_space<vmem>>, vector<8x128xf32>
    tpu.vector_store %arg8[%c0_47, %c0_48], %113 {strides = array<i32>} : memref<8x128xf32, #tpu.memory_space<vmem>>, vector<8x128xf32>,
    %c0_49 = arith.constant 0 : index
    %c0_50 = arith.constant 0 : index
    %115 = vector.load %arg9[%c0_49, %c0_50] : memref<8x128xf32, #tpu.memory_space<vmem>>, vector<8x128xf32>
    tpu.vector_store %arg9[%c0_49, %c0_50], %111 {strides = array<i32>} : memref<8x128xf32, #tpu.memory_space<vmem>>, vector<8x128xf32>,
    %c8_i32_51 = arith.constant 8 : i32
    %116 = arith.muli %c2_i32, %c8_i32_51 : i32
    %117 = tpu.assume_multiple %116, 8 : i32
    %118 = arith.index_cast %117 : i32 to index
    %c0_52 = arith.constant 0 : index
    %119 = vector.load %arg7[%118, %c0_52] : memref<64x128xf32, #tpu.memory_space<vmem>>, vector<8x128xf32>
    tpu.vector_store %arg7[%118, %c0_52], %113 {strides = array<i32>} : memref<64x128xf32, #tpu.memory_space<vmem>>, vector<8x128xf32>,
    %c3_i32 = arith.constant 3 : i32
    %120 = arith.index_cast %c3_i32 : i32 to index
    %c0_53 = arith.constant 0 : index
    %c0_54 = arith.constant 0 : index
    %121 = vector.load %arg2[%120, %c0_53, %c0_54] : memref<8x8x512xf32, #tpu.memory_space<vmem>>, vector<1x8x512xf32>
    %122 = vector.shape_cast %121 : vector<1x8x512xf32> to vector<8x512xf32>
    %c0_55 = arith.constant 0 : index
    %c0_56 = arith.constant 0 : index
    %123 = vector.load %arg8[%c0_55, %c0_56] : memref<8x128xf32, #tpu.memory_space<vmem>>, vector<8x128xf32>
    %c0_57 = arith.constant 0 : index
    %c0_58 = arith.constant 0 : index
    %124 = vector.load %arg3[%c0_57, %c0_58] : memref<128x512xf32, #tpu.memory_space<vmem>>, vector<128x512xf32>
    %cst_59 = arith.constant dense<0.000000e+00> : vector<8x512xf32>
    %125 = tpu.matmul %123, %124, %cst_59 {dimension_numbers = #tpu.dot_dimension_numbers<[1], [0], [0], [1], [0, 0, 1, 1], [], []>} : vector<8x128xf32>, vector<128x512xf32>, vector<8x512xf32> -> vector<8x512xf32>
    %126 = arith.addf %122, %125 : vector<8x512xf32>
    %127 = vector.extract_strided_slice %126 {offsets = [0, 0], sizes = [8, 128], strides = [1, 1]} : vector<8x512xf32> to vector<8x128xf32>
    %128 = arith.negf %127 : vector<8x128xf32>
    %129 = math.exp %128 : vector<8x128xf32>
    %cst_60 = arith.constant 1.000000e+00 : f32
    %130 = vector.broadcast %cst_60 : f32 to vector<8x128xf32>
    %131 = arith.addf %130, %129 : vector<8x128xf32>
    %132 = arith.divf %130, %131 : vector<8x128xf32>
    %133 = vector.extract_strided_slice %126 {offsets = [0, 128], sizes = [8, 128], strides = [1, 1]} : vector<8x512xf32> to vector<8x128xf32>
    %134 = arith.negf %133 : vector<8x128xf32>
    %135 = math.exp %134 : vector<8x128xf32>
    %cst_61 = arith.constant 1.000000e+00 : f32
    %136 = vector.broadcast %cst_61 : f32 to vector<8x128xf32>
    %137 = arith.addf %136, %135 : vector<8x128xf32>
    %138 = arith.divf %136, %137 : vector<8x128xf32>
    %139 = vector.extract_strided_slice %126 {offsets = [0, 256], sizes = [8, 128], strides = [1, 1]} : vector<8x512xf32> to vector<8x128xf32>
    %140 = math.tanh %139 : vector<8x128xf32>
    %141 = vector.extract_strided_slice %126 {offsets = [0, 384], sizes = [8, 128], strides = [1, 1]} : vector<8x512xf32> to vector<8x128xf32>
    %142 = arith.negf %141 : vector<8x128xf32>
    %143 = math.exp %142 : vector<8x128xf32>
    %cst_62 = arith.constant 1.000000e+00 : f32
    %144 = vector.broadcast %cst_62 : f32 to vector<8x128xf32>
    %145 = arith.addf %144, %143 : vector<8x128xf32>
    %146 = arith.divf %144, %145 : vector<8x128xf32>
    %c0_63 = arith.constant 0 : index
    %c0_64 = arith.constant 0 : index
    %147 = vector.load %arg9[%c0_63, %c0_64] : memref<8x128xf32, #tpu.memory_space<vmem>>, vector<8x128xf32>
    %148 = arith.mulf %138, %147 : vector<8x128xf32>
    %149 = arith.mulf %132, %140 : vector<8x128xf32>
    %150 = arith.addf %148, %149 : vector<8x128xf32>
    %151 = math.tanh %150 : vector<8x128xf32>
    %152 = arith.mulf %146, %151 : vector<8x128xf32>
    %c0_65 = arith.constant 0 : index
    %c0_66 = arith.constant 0 : index
    %153 = vector.load %arg8[%c0_65, %c0_66] : memref<8x128xf32, #tpu.memory_space<vmem>>, vector<8x128xf32>
    tpu.vector_store %arg8[%c0_65, %c0_66], %152 {strides = array<i32>} : memref<8x128xf32, #tpu.memory_space<vmem>>, vector<8x128xf32>,
    %c0_67 = arith.constant 0 : index
    %c0_68 = arith.constant 0 : index
    %154 = vector.load %arg9[%c0_67, %c0_68] : memref<8x128xf32, #tpu.memory_space<vmem>>, vector<8x128xf32>
    tpu.vector_store %arg9[%c0_67, %c0_68], %150 {strides = array<i32>} : memref<8x128xf32, #tpu.memory_space<vmem>>, vector<8x128xf32>,
    %c8_i32_69 = arith.constant 8 : i32
    %155 = arith.muli %c3_i32, %c8_i32_69 : i32
    %156 = tpu.assume_multiple %155, 8 : i32
    %157 = arith.index_cast %156 : i32 to index
    %c0_70 = arith.constant 0 : index
    %158 = vector.load %arg7[%157, %c0_70] : memref<64x128xf32, #tpu.memory_space<vmem>>, vector<8x128xf32>
    tpu.vector_store %arg7[%157, %c0_70], %152 {strides = array<i32>} : memref<64x128xf32, #tpu.memory_space<vmem>>, vector<8x128xf32>,
    %c4_i32 = arith.constant 4 : i32
    %159 = arith.index_cast %c4_i32 : i32 to index
    %c0_71 = arith.constant 0 : index
    %c0_72 = arith.constant 0 : index
    %160 = vector.load %arg2[%159, %c0_71, %c0_72] : memref<8x8x512xf32, #tpu.memory_space<vmem>>, vector<1x8x512xf32>
    %161 = vector.shape_cast %160 : vector<1x8x512xf32> to vector<8x512xf32>
    %c0_73 = arith.constant 0 : index
    %c0_74 = arith.constant 0 : index
    %162 = vector.load %arg8[%c0_73, %c0_74] : memref<8x128xf32, #tpu.memory_space<vmem>>, vector<8x128xf32>
    %c0_75 = arith.constant 0 : index
    %c0_76 = arith.constant 0 : index
    %163 = vector.load %arg3[%c0_75, %c0_76] : memref<128x512xf32, #tpu.memory_space<vmem>>, vector<128x512xf32>
    %cst_77 = arith.constant dense<0.000000e+00> : vector<8x512xf32>
    %164 = tpu.matmul %162, %163, %cst_77 {dimension_numbers = #tpu.dot_dimension_numbers<[1], [0], [0], [1], [0, 0, 1, 1], [], []>} : vector<8x128xf32>, vector<128x512xf32>, vector<8x512xf32> -> vector<8x512xf32>
    %165 = arith.addf %161, %164 : vector<8x512xf32>
    %166 = vector.extract_strided_slice %165 {offsets = [0, 0], sizes = [8, 128], strides = [1, 1]} : vector<8x512xf32> to vector<8x128xf32>
    %167 = arith.negf %166 : vector<8x128xf32>
    %168 = math.exp %167 : vector<8x128xf32>
    %cst_78 = arith.constant 1.000000e+00 : f32
    %169 = vector.broadcast %cst_78 : f32 to vector<8x128xf32>
    %170 = arith.addf %169, %168 : vector<8x128xf32>
    %171 = arith.divf %169, %170 : vector<8x128xf32>
    %172 = vector.extract_strided_slice %165 {offsets = [0, 128], sizes = [8, 128], strides = [1, 1]} : vector<8x512xf32> to vector<8x128xf32>
    %173 = arith.negf %172 : vector<8x128xf32>
    %174 = math.exp %173 : vector<8x128xf32>
    %cst_79 = arith.constant 1.000000e+00 : f32
    %175 = vector.broadcast %cst_79 : f32 to vector<8x128xf32>
    %176 = arith.addf %175, %174 : vector<8x128xf32>
    %177 = arith.divf %175, %176 : vector<8x128xf32>
    %178 = vector.extract_strided_slice %165 {offsets = [0, 256], sizes = [8, 128], strides = [1, 1]} : vector<8x512xf32> to vector<8x128xf32>
    %179 = math.tanh %178 : vector<8x128xf32>
    %180 = vector.extract_strided_slice %165 {offsets = [0, 384], sizes = [8, 128], strides = [1, 1]} : vector<8x512xf32> to vector<8x128xf32>
    %181 = arith.negf %180 : vector<8x128xf32>
    %182 = math.exp %181 : vector<8x128xf32>
    %cst_80 = arith.constant 1.000000e+00 : f32
    %183 = vector.broadcast %cst_80 : f32 to vector<8x128xf32>
    %184 = arith.addf %183, %182 : vector<8x128xf32>
    %185 = arith.divf %183, %184 : vector<8x128xf32>
    %c0_81 = arith.constant 0 : index
    %c0_82 = arith.constant 0 : index
    %186 = vector.load %arg9[%c0_81, %c0_82] : memref<8x128xf32, #tpu.memory_space<vmem>>, vector<8x128xf32>
    %187 = arith.mulf %177, %186 : vector<8x128xf32>
    %188 = arith.mulf %171, %179 : vector<8x128xf32>
    %189 = arith.addf %187, %188 : vector<8x128xf32>
    %190 = math.tanh %189 : vector<8x128xf32>
    %191 = arith.mulf %185, %190 : vector<8x128xf32>
    %c0_83 = arith.constant 0 : index
    %c0_84 = arith.constant 0 : index
    %192 = vector.load %arg8[%c0_83, %c0_84] : memref<8x128xf32, #tpu.memory_space<vmem>>, vector<8x128xf32>
    tpu.vector_store %arg8[%c0_83, %c0_84], %191 {strides = array<i32>} : memref<8x128xf32, #tpu.memory_space<vmem>>, vector<8x128xf32>,
    %c0_85 = arith.constant 0 : index
    %c0_86 = arith.constant 0 : index
    %193 = vector.load %arg9[%c0_85, %c0_86] : memref<8x128xf32, #tpu.memory_space<vmem>>, vector<8x128xf32>
    tpu.vector_store %arg9[%c0_85, %c0_86], %189 {strides = array<i32>} : memref<8x128xf32, #tpu.memory_space<vmem>>, vector<8x128xf32>,
    %c8_i32_87 = arith.constant 8 : i32
    %194 = arith.muli %c4_i32, %c8_i32_87 : i32
    %195 = tpu.assume_multiple %194, 8 : i32
    %196 = arith.index_cast %195 : i32 to index
    %c0_88 = arith.constant 0 : index
    %197 = vector.load %arg7[%196, %c0_88] : memref<64x128xf32, #tpu.memory_space<vmem>>, vector<8x128xf32>
    tpu.vector_store %arg7[%196, %c0_88], %191 {strides = array<i32>} : memref<64x128xf32, #tpu.memory_space<vmem>>, vector<8x128xf32>,
    %c5_i32 = arith.constant 5 : i32
    %198 = arith.index_cast %c5_i32 : i32 to index
    %c0_89 = arith.constant 0 : index
    %c0_90 = arith.constant 0 : index
    %199 = vector.load %arg2[%198, %c0_89, %c0_90] : memref<8x8x512xf32, #tpu.memory_space<vmem>>, vector<1x8x512xf32>
    %200 = vector.shape_cast %199 : vector<1x8x512xf32> to vector<8x512xf32>
    %c0_91 = arith.constant 0 : index
    %c0_92 = arith.constant 0 : index
    %201 = vector.load %arg8[%c0_91, %c0_92] : memref<8x128xf32, #tpu.memory_space<vmem>>, vector<8x128xf32>
    %c0_93 = arith.constant 0 : index
    %c0_94 = arith.constant 0 : index
    %202 = vector.load %arg3[%c0_93, %c0_94] : memref<128x512xf32, #tpu.memory_space<vmem>>, vector<128x512xf32>
    %cst_95 = arith.constant dense<0.000000e+00> : vector<8x512xf32>
    %203 = tpu.matmul %201, %202, %cst_95 {dimension_numbers = #tpu.dot_dimension_numbers<[1], [0], [0], [1], [0, 0, 1, 1], [], []>} : vector<8x128xf32>, vector<128x512xf32>, vector<8x512xf32> -> vector<8x512xf32>
    %204 = arith.addf %200, %203 : vector<8x512xf32>
    %205 = vector.extract_strided_slice %204 {offsets = [0, 0], sizes = [8, 128], strides = [1, 1]} : vector<8x512xf32> to vector<8x128xf32>
    %206 = arith.negf %205 : vector<8x128xf32>
    %207 = math.exp %206 : vector<8x128xf32>
    %cst_96 = arith.constant 1.000000e+00 : f32
    %208 = vector.broadcast %cst_96 : f32 to vector<8x128xf32>
    %209 = arith.addf %208, %207 : vector<8x128xf32>
    %210 = arith.divf %208, %209 : vector<8x128xf32>
    %211 = vector.extract_strided_slice %204 {offsets = [0, 128], sizes = [8, 128], strides = [1, 1]} : vector<8x512xf32> to vector<8x128xf32>
    %212 = arith.negf %211 : vector<8x128xf32>
    %213 = math.exp %212 : vector<8x128xf32>
    %cst_97 = arith.constant 1.000000e+00 : f32
    %214 = vector.broadcast %cst_97 : f32 to vector<8x128xf32>
    %215 = arith.addf %214, %213 : vector<8x128xf32>
    %216 = arith.divf %214, %215 : vector<8x128xf32>
    %217 = vector.extract_strided_slice %204 {offsets = [0, 256], sizes = [8, 128], strides = [1, 1]} : vector<8x512xf32> to vector<8x128xf32>
    %218 = math.tanh %217 : vector<8x128xf32>
    %219 = vector.extract_strided_slice %204 {offsets = [0, 384], sizes = [8, 128], strides = [1, 1]} : vector<8x512xf32> to vector<8x128xf32>
    %220 = arith.negf %219 : vector<8x128xf32>
    %221 = math.exp %220 : vector<8x128xf32>
    %cst_98 = arith.constant 1.000000e+00 : f32
    %222 = vector.broadcast %cst_98 : f32 to vector<8x128xf32>
    %223 = arith.addf %222, %221 : vector<8x128xf32>
    %224 = arith.divf %222, %223 : vector<8x128xf32>
    %c0_99 = arith.constant 0 : index
    %c0_100 = arith.constant 0 : index
    %225 = vector.load %arg9[%c0_99, %c0_100] : memref<8x128xf32, #tpu.memory_space<vmem>>, vector<8x128xf32>
    %226 = arith.mulf %216, %225 : vector<8x128xf32>
    %227 = arith.mulf %210, %218 : vector<8x128xf32>
    %228 = arith.addf %226, %227 : vector<8x128xf32>
    %229 = math.tanh %228 : vector<8x128xf32>
    %230 = arith.mulf %224, %229 : vector<8x128xf32>
    %c0_101 = arith.constant 0 : index
    %c0_102 = arith.constant 0 : index
    %231 = vector.load %arg8[%c0_101, %c0_102] : memref<8x128xf32, #tpu.memory_space<vmem>>, vector<8x128xf32>
    tpu.vector_store %arg8[%c0_101, %c0_102], %230 {strides = array<i32>} : memref<8x128xf32, #tpu.memory_space<vmem>>, vector<8x128xf32>,
    %c0_103 = arith.constant 0 : index
    %c0_104 = arith.constant 0 : index
    %232 = vector.load %arg9[%c0_103, %c0_104] : memref<8x128xf32, #tpu.memory_space<vmem>>, vector<8x128xf32>
    tpu.vector_store %arg9[%c0_103, %c0_104], %228 {strides = array<i32>} : memref<8x128xf32, #tpu.memory_space<vmem>>, vector<8x128xf32>,
    %c8_i32_105 = arith.constant 8 : i32
    %233 = arith.muli %c5_i32, %c8_i32_105 : i32
    %234 = tpu.assume_multiple %233, 8 : i32
    %235 = arith.index_cast %234 : i32 to index
    %c0_106 = arith.constant 0 : index
    %236 = vector.load %arg7[%235, %c0_106] : memref<64x128xf32, #tpu.memory_space<vmem>>, vector<8x128xf32>
    tpu.vector_store %arg7[%235, %c0_106], %230 {strides = array<i32>} : memref<64x128xf32, #tpu.memory_space<vmem>>, vector<8x128xf32>,
    %c6_i32 = arith.constant 6 : i32
    %237 = arith.index_cast %c6_i32 : i32 to index
    %c0_107 = arith.constant 0 : index
    %c0_108 = arith.constant 0 : index
    %238 = vector.load %arg2[%237, %c0_107, %c0_108] : memref<8x8x512xf32, #tpu.memory_space<vmem>>, vector<1x8x512xf32>
    %239 = vector.shape_cast %238 : vector<1x8x512xf32> to vector<8x512xf32>
    %c0_109 = arith.constant 0 : index
    %c0_110 = arith.constant 0 : index
    %240 = vector.load %arg8[%c0_109, %c0_110] : memref<8x128xf32, #tpu.memory_space<vmem>>, vector<8x128xf32>
    %c0_111 = arith.constant 0 : index
    %c0_112 = arith.constant 0 : index
    %241 = vector.load %arg3[%c0_111, %c0_112] : memref<128x512xf32, #tpu.memory_space<vmem>>, vector<128x512xf32>
    %cst_113 = arith.constant dense<0.000000e+00> : vector<8x512xf32>
    %242 = tpu.matmul %240, %241, %cst_113 {dimension_numbers = #tpu.dot_dimension_numbers<[1], [0], [0], [1], [0, 0, 1, 1], [], []>} : vector<8x128xf32>, vector<128x512xf32>, vector<8x512xf32> -> vector<8x512xf32>
    %243 = arith.addf %239, %242 : vector<8x512xf32>
    %244 = vector.extract_strided_slice %243 {offsets = [0, 0], sizes = [8, 128], strides = [1, 1]} : vector<8x512xf32> to vector<8x128xf32>
    %245 = arith.negf %244 : vector<8x128xf32>
    %246 = math.exp %245 : vector<8x128xf32>
    %cst_114 = arith.constant 1.000000e+00 : f32
    %247 = vector.broadcast %cst_114 : f32 to vector<8x128xf32>
    %248 = arith.addf %247, %246 : vector<8x128xf32>
    %249 = arith.divf %247, %248 : vector<8x128xf32>
    %250 = vector.extract_strided_slice %243 {offsets = [0, 128], sizes = [8, 128], strides = [1, 1]} : vector<8x512xf32> to vector<8x128xf32>
    %251 = arith.negf %250 : vector<8x128xf32>
    %252 = math.exp %251 : vector<8x128xf32>
    %cst_115 = arith.constant 1.000000e+00 : f32
    %253 = vector.broadcast %cst_115 : f32 to vector<8x128xf32>
    %254 = arith.addf %253, %252 : vector<8x128xf32>
    %255 = arith.divf %253, %254 : vector<8x128xf32>
    %256 = vector.extract_strided_slice %243 {offsets = [0, 256], sizes = [8, 128], strides = [1, 1]} : vector<8x512xf32> to vector<8x128xf32>
    %257 = math.tanh %256 : vector<8x128xf32>
    %258 = vector.extract_strided_slice %243 {offsets = [0, 384], sizes = [8, 128], strides = [1, 1]} : vector<8x512xf32> to vector<8x128xf32>
    %259 = arith.negf %258 : vector<8x128xf32>
    %260 = math.exp %259 : vector<8x128xf32>
    %cst_116 = arith.constant 1.000000e+00 : f32
    %261 = vector.broadcast %cst_116 : f32 to vector<8x128xf32>
    %262 = arith.addf %261, %260 : vector<8x128xf32>
    %263 = arith.divf %261, %262 : vector<8x128xf32>
    %c0_117 = arith.constant 0 : index
    %c0_118 = arith.constant 0 : index
    %264 = vector.load %arg9[%c0_117, %c0_118] : memref<8x128xf32, #tpu.memory_space<vmem>>, vector<8x128xf32>
    %265 = arith.mulf %255, %264 : vector<8x128xf32>
    %266 = arith.mulf %249, %257 : vector<8x128xf32>
    %267 = arith.addf %265, %266 : vector<8x128xf32>
    %268 = math.tanh %267 : vector<8x128xf32>
    %269 = arith.mulf %263, %268 : vector<8x128xf32>
    %c0_119 = arith.constant 0 : index
    %c0_120 = arith.constant 0 : index
    %270 = vector.load %arg8[%c0_119, %c0_120] : memref<8x128xf32, #tpu.memory_space<vmem>>, vector<8x128xf32>
    tpu.vector_store %arg8[%c0_119, %c0_120], %269 {strides = array<i32>} : memref<8x128xf32, #tpu.memory_space<vmem>>, vector<8x128xf32>,
    %c0_121 = arith.constant 0 : index
    %c0_122 = arith.constant 0 : index
    %271 = vector.load %arg9[%c0_121, %c0_122] : memref<8x128xf32, #tpu.memory_space<vmem>>, vector<8x128xf32>
    tpu.vector_store %arg9[%c0_121, %c0_122], %267 {strides = array<i32>} : memref<8x128xf32, #tpu.memory_space<vmem>>, vector<8x128xf32>,
    %c8_i32_123 = arith.constant 8 : i32
    %272 = arith.muli %c6_i32, %c8_i32_123 : i32
    %273 = tpu.assume_multiple %272, 8 : i32
    %274 = arith.index_cast %273 : i32 to index
    %c0_124 = arith.constant 0 : index
    %275 = vector.load %arg7[%274, %c0_124] : memref<64x128xf32, #tpu.memory_space<vmem>>, vector<8x128xf32>
    tpu.vector_store %arg7[%274, %c0_124], %269 {strides = array<i32>} : memref<64x128xf32, #tpu.memory_space<vmem>>, vector<8x128xf32>,
    %c7_i32 = arith.constant 7 : i32
    %276 = arith.index_cast %c7_i32 : i32 to index
    %c0_125 = arith.constant 0 : index
    %c0_126 = arith.constant 0 : index
    %277 = vector.load %arg2[%276, %c0_125, %c0_126] : memref<8x8x512xf32, #tpu.memory_space<vmem>>, vector<1x8x512xf32>
    %278 = vector.shape_cast %277 : vector<1x8x512xf32> to vector<8x512xf32>
    %c0_127 = arith.constant 0 : index
    %c0_128 = arith.constant 0 : index
    %279 = vector.load %arg8[%c0_127, %c0_128] : memref<8x128xf32, #tpu.memory_space<vmem>>, vector<8x128xf32>
    %c0_129 = arith.constant 0 : index
    %c0_130 = arith.constant 0 : index
    %280 = vector.load %arg3[%c0_129, %c0_130] : memref<128x512xf32, #tpu.memory_space<vmem>>, vector<128x512xf32>
    %cst_131 = arith.constant dense<0.000000e+00> : vector<8x512xf32>
    %281 = tpu.matmul %279, %280, %cst_131 {dimension_numbers = #tpu.dot_dimension_numbers<[1], [0], [0], [1], [0, 0, 1, 1], [], []>} : vector<8x128xf32>, vector<128x512xf32>, vector<8x512xf32> -> vector<8x512xf32>
    %282 = arith.addf %278, %281 : vector<8x512xf32>
    %283 = vector.extract_strided_slice %282 {offsets = [0, 0], sizes = [8, 128], strides = [1, 1]} : vector<8x512xf32> to vector<8x128xf32>
    %284 = arith.negf %283 : vector<8x128xf32>
    %285 = math.exp %284 : vector<8x128xf32>
    %cst_132 = arith.constant 1.000000e+00 : f32
    %286 = vector.broadcast %cst_132 : f32 to vector<8x128xf32>
    %287 = arith.addf %286, %285 : vector<8x128xf32>
    %288 = arith.divf %286, %287 : vector<8x128xf32>
    %289 = vector.extract_strided_slice %282 {offsets = [0, 128], sizes = [8, 128], strides = [1, 1]} : vector<8x512xf32> to vector<8x128xf32>
    %290 = arith.negf %289 : vector<8x128xf32>
    %291 = math.exp %290 : vector<8x128xf32>
    %cst_133 = arith.constant 1.000000e+00 : f32
    %292 = vector.broadcast %cst_133 : f32 to vector<8x128xf32>
    %293 = arith.addf %292, %291 : vector<8x128xf32>
    %294 = arith.divf %292, %293 : vector<8x128xf32>
    %295 = vector.extract_strided_slice %282 {offsets = [0, 256], sizes = [8, 128], strides = [1, 1]} : vector<8x512xf32> to vector<8x128xf32>
    %296 = math.tanh %295 : vector<8x128xf32>
    %297 = vector.extract_strided_slice %282 {offsets = [0, 384], sizes = [8, 128], strides = [1, 1]} : vector<8x512xf32> to vector<8x128xf32>
    %298 = arith.negf %297 : vector<8x128xf32>
    %299 = math.exp %298 : vector<8x128xf32>
    %cst_134 = arith.constant 1.000000e+00 : f32
    %300 = vector.broadcast %cst_134 : f32 to vector<8x128xf32>
    %301 = arith.addf %300, %299 : vector<8x128xf32>
    %302 = arith.divf %300, %301 : vector<8x128xf32>
    %c0_135 = arith.constant 0 : index
    %c0_136 = arith.constant 0 : index
    %303 = vector.load %arg9[%c0_135, %c0_136] : memref<8x128xf32, #tpu.memory_space<vmem>>, vector<8x128xf32>
    %304 = arith.mulf %294, %303 : vector<8x128xf32>
    %305 = arith.mulf %288, %296 : vector<8x128xf32>
    %306 = arith.addf %304, %305 : vector<8x128xf32>
    %307 = math.tanh %306 : vector<8x128xf32>
    %308 = arith.mulf %302, %307 : vector<8x128xf32>
    %c0_137 = arith.constant 0 : index
    %c0_138 = arith.constant 0 : index
    %309 = vector.load %arg8[%c0_137, %c0_138] : memref<8x128xf32, #tpu.memory_space<vmem>>, vector<8x128xf32>
    tpu.vector_store %arg8[%c0_137, %c0_138], %308 {strides = array<i32>} : memref<8x128xf32, #tpu.memory_space<vmem>>, vector<8x128xf32>,
    %c0_139 = arith.constant 0 : index
    %c0_140 = arith.constant 0 : index
    %310 = vector.load %arg9[%c0_139, %c0_140] : memref<8x128xf32, #tpu.memory_space<vmem>>, vector<8x128xf32>
    tpu.vector_store %arg9[%c0_139, %c0_140], %306 {strides = array<i32>} : memref<8x128xf32, #tpu.memory_space<vmem>>, vector<8x128xf32>,
    %c8_i32_141 = arith.constant 8 : i32
    %311 = arith.muli %c7_i32, %c8_i32_141 : i32
    %312 = tpu.assume_multiple %311, 8 : i32
    %313 = arith.index_cast %312 : i32 to index
    %c0_142 = arith.constant 0 : index
    %314 = vector.load %arg7[%313, %c0_142] : memref<64x128xf32, #tpu.memory_space<vmem>>, vector<8x128xf32>
    tpu.vector_store %arg7[%313, %c0_142], %308 {strides = array<i32>} : memref<64x128xf32, #tpu.memory_space<vmem>>, vector<8x128xf32>,
    %c8_i32_143 = arith.constant 8 : i32
    %c0_144 = arith.constant 0 : index
    %c0_145 = arith.constant 0 : index
    %315 = vector.load %arg7[%c0_144, %c0_145] : memref<64x128xf32, #tpu.memory_space<vmem>>, vector<64x128xf32>
    %316 = arith.truncf %315 : vector<64x128xf32> to vector<64x128xbf16>
    %c0_146 = arith.constant 0 : index
    %c0_147 = arith.constant 0 : index
    %317 = vector.load %arg4[%c0_146, %c0_147] : memref<128x128xbf16, #tpu.memory_space<vmem>>, vector<128x128xbf16>
    %cst_148 = arith.constant dense<0.000000e+00> : vector<64x128xf32>
    %318 = tpu.matmul %316, %317, %cst_148 {dimension_numbers = #tpu.dot_dimension_numbers<[1], [0], [0], [1], [0, 0, 1, 1], [], []>} : vector<64x128xbf16>, vector<128x128xbf16>, vector<64x128xf32> -> vector<64x128xf32>
    %c0_149 = arith.constant 0 : index
    %c0_150 = arith.constant 0 : index
    %319 = vector.load %arg5[%c0_149, %c0_150] : memref<1x128xf32, #tpu.memory_space<vmem>>, vector<1x128xf32>
    %320 = vector.broadcast %319 : vector<1x128xf32> to vector<64x128xf32>
    %321 = arith.addf %318, %320 : vector<64x128xf32>
    %322 = vector.shape_cast %321 : vector<64x128xf32> to vector<8x8x128xf32>
    %c0_151 = arith.constant 0 : index
    %c0_152 = arith.constant 0 : index
    %c0_153 = arith.constant 0 : index
    %323 = vector.load %arg6[%c0_151, %c0_152, %c0_153] : memref<8x8x128xf32, #tpu.memory_space<vmem>>, vector<8x8x128xf32>
    tpu.vector_store %arg6[%c0_151, %c0_152, %c0_153], %322 {strides = array<i32>} : memref<8x8x128xf32, #tpu.memory_space<vmem>>, vector<8x8x128xf32>,
    return
  }
  func.func @transform_0(%arg0: i32, %arg1: i32) -> (i32, i32, i32) {
    %c0_i32 = arith.constant 0 : i32
    %c0_i32_0 = arith.constant 0 : i32
    return %arg1, %arg0, %c0_i32 : i32, i32, i32
  }
  func.func @transform_1(%arg0: i32, %arg1: i32) -> (i32, i32) {
    %c0_i32 = arith.constant 0 : i32
    %c0_i32_0 = arith.constant 0 : i32
    %c0_i32_1 = arith.constant 0 : i32
    return %c0_i32, %c0_i32_0 : i32, i32
  }
  func.func @transform_2(%arg0: i32, %arg1: i32) -> (i32, i32) {
    %c0_i32 = arith.constant 0 : i32
    %c0_i32_0 = arith.constant 0 : i32
    %c0_i32_1 = arith.constant 0 : i32
    return %c0_i32, %c0_i32_0 : i32, i32
  }
  func.func @transform_3(%arg0: i32, %arg1: i32) -> (i32, i32) {
    %c0_i32 = arith.constant 0 : i32
    %c0_i32_0 = arith.constant 0 : i32
    %c0_i32_1 = arith.constant 0 : i32
    return %c0_i32, %c0_i32_0 : i32, i32
  }
  func.func @transform_4(%arg0: i32, %arg1: i32) -> (i32, i32, i32) {
    %c0_i32 = arith.constant 0 : i32
    %c0_i32_0 = arith.constant 0 : i32
    return %arg1, %arg0, %c0_i32 : i32, i32, i32
  }
}

</mosaic_0001>

<llo_original>
// kernel: tpu_custom_call.1
$region0: #{tpu_custom_call.1}
  #allocation0 [shape = 'u32[]', space=smem, size = 0x4, offset = 0x4, fixed_abs, tag = 'smem constant byte address 0x4 - core index']
  #allocation1 [shape = 'u32[72,128]{1,0:T(1,128)}', space=vmem, size = 0x9000, scoped, tag = 'internal scratch']
  #allocation2 [shape = 'f32[64,128]{1,0:T(8,128)}', space=vmem, size = 0x8000, scoped, tag = 'scratch operand']
  #allocation3 [shape = 'f32[8,128]{1,0:T(8,128)}', space=vmem, size = 0x1000, scoped, tag = 'scratch operand']
  #allocation4 [shape = 'f32[8,128]{1,0:T(8,128)}', space=vmem, size = 0x1000, scoped, tag = 'scratch operand']
  %s0 = inlined_call_operand.hbm [shape: f32[8,8,512], index: 0, kind: input, shape index: {}]
  %s1 = inlined_call_operand.hbm [shape: f32[128,512], index: 1, kind: input, shape index: {}]
  %s2 = inlined_call_operand.hbm [shape: bf16[128,128], index: 2, kind: input, shape index: {}]
  %s3 = inlined_call_operand.vmem [shape: f32[1,128], index: 3, kind: input, shape index: {}]
  %s4 = inlined_call_operand.hbm [shape: f32[8,8,128], index: 4, kind: output, shape index: {}]
  %s5 = sld [smem:[#allocation0]]
  $region42: #{tpu_custom_call.1} parent=0
    _
  %s7 = ssub.s32 1, %s5
  %s8 = scalar_select 0, %s7, %s5
  $region1: #{tpu_custom_call.1} parent=0
    #allocation5 [shape = 'u8[131072]{0}', space=vmem, size = 0x20000, scoped, tag = 'input window, operand 0, single buffered']
    #allocation6 [shape = 's32[1]{0}', space=sflag, size = 0x4, scoped, tag = 'scoped memory for tpu_custom_call.1']
    #allocation7 [shape = 's32[1]{0}', space=sflag, size = 0x4, scoped, tag = 'scoped memory for tpu_custom_call.1']
    #allocation8 [shape = 'u8[262144]{0}', space=vmem, size = 0x40000, scoped, tag = 'input window, operand 1, single buffered']
    #allocation9 [shape = 's32[1]{0}', space=sflag, size = 0x4, scoped, tag = 'scoped memory for tpu_custom_call.1']
    #allocation10 [shape = 'u8[32768]{0}', space=vmem, size = 0x8000, scoped, tag = 'input window, operand 2, single buffered']
    #allocation11 [shape = 'u8[32768]{0}', space=vmem, size = 0x8000, scoped, tag = 'output window, operand 0, single buffered']
    %9 = vsyncpa [#allocation6], 0
    %10 = vsyncpa [#allocation9], 0
    %11 = vsyncpa [#allocation7], 0
    // Predicated region
    $region2: #{tpu_custom_call.1} parent=1 // pred_check
      _
    $region3: #{tpu_custom_call.1} parent=1 // pred_check_branch
      %13 = sbr.rel (0) target = $region5
    $region4: #{tpu_custom_call.1} parent=1 // pred_region
      %15 = vsyncadd [#allocation6], 0
      %s16 = sshll.u32 %s0, 4
      %s17 = int_to_ptr.hbm [resolvable:$true] %s16
      %s18 = sshll.u32 [#allocation5], 4
      %s19 = int_to_ptr.vmem [resolvable:$true] %s18
      %24 = dma.hbm_to_vmem [thread:$0]  %s17, 4096, %s19, [#allocation6], 512, 512, 32
    $region5: #{tpu_custom_call.1} parent=1 // pred_fallthru
      _
    // Predicated region
    $region6: #{tpu_custom_call.1} parent=1 // pred_check
      _
    $region7: #{tpu_custom_call.1} parent=1 // pred_check_branch
      %26 = sbr.rel (0) target = $region9
    $region8: #{tpu_custom_call.1} parent=1 // pred_region
      %28 = vsyncadd [#allocation9], 0
      %s29 = sshll.u32 %s1, 4
      %s30 = int_to_ptr.hbm [resolvable:$true] %s29
      %s31 = sshll.u32 [#allocation8], 4
      %s32 = int_to_ptr.vmem [resolvable:$true] %s31
      %37 = dma.hbm_to_vmem [thread:$0]  %s30, 8192, %s32, [#allocation9], 512, 512, 32
    $region9: #{tpu_custom_call.1} parent=1 // pred_fallthru
      _
    // Predicated region
    $region10: #{tpu_custom_call.1} parent=1 // pred_check
      _
    $region11: #{tpu_custom_call.1} parent=1 // pred_check_branch
      %39 = sbr.rel (0) target = $region13
    $region12: #{tpu_custom_call.1} parent=1 // pred_region
      %41 = vsyncadd [#allocation9], 0
      %s42 = sshll.u32 %s2, 4
      %s43 = int_to_ptr.hbm [resolvable:$true] %s42
      %s44 = sshll.u32 [#allocation10], 4
      %s45 = int_to_ptr.vmem [resolvable:$true] %s44
      %50 = dma.hbm_to_vmem [thread:$0]  %s43, 1024, %s45, [#allocation9], 64, 64, 4
    $region13: #{tpu_custom_call.1} parent=1 // pred_fallthru
      _
    // Predicated region
    $region14: #{tpu_custom_call.1} parent=1 // pred_check
      _
    $region15: #{tpu_custom_call.1} parent=1 // pred_check_branch
      %52 = sbr.rel (0) target = $region17
    $region16: #{tpu_custom_call.1} parent=1 // pred_region
      _
    $region17: #{tpu_custom_call.1} parent=1 // pred_fallthru
      _
    // Predicated region
    $region18: #{tpu_custom_call.1} parent=1 // pred_check
      _
    $region19: #{tpu_custom_call.1} parent=1 // pred_check_branch
      %54 = sbr.rel (0) target = $region21
    $region20: #{tpu_custom_call.1} parent=1 // pred_region
      %56 = dma.done [#allocation6], 4096
    $region21: #{tpu_custom_call.1} parent=1 // pred_fallthru
      _
    // Predicated region
    $region22: #{tpu_custom_call.1} parent=1 // pred_check
      _
    $region23: #{tpu_custom_call.1} parent=1 // pred_check_branch
      %58 = sbr.rel (0) target = $region25
    $region24: #{tpu_custom_call.1} parent=1 // pred_region
      %60 = dma.done [#allocation9], 8192
    $region25: #{tpu_custom_call.1} parent=1 // pred_fallthru
      _
    // Predicated region
    $region26: #{tpu_custom_call.1} parent=1 // pred_check
      _
    $region27: #{tpu_custom_call.1} parent=1 // pred_check_branch
      %62 = sbr.rel (0) target = $region29
    $region28: #{tpu_custom_call.1} parent=1 // pred_region
      %64 = dma.done [#allocation9], 1024
    $region29: #{tpu_custom_call.1} parent=1 // pred_fallthru
      _
    %p65 = scmp.eq.s32.totalorder 0, 0
    // Predicated region
    $region30: #{tpu_custom_call.1} parent=1 // pred_check
      %p66 = pneg %p65
    $region31: #{tpu_custom_call.1} parent=1 // pred_check_branch
      %68 = sbr.rel (%p66) target = $region33
    $region32: #{tpu_custom_call.1} parent=1 // pred_region
      %69 = vst [vmem:[#allocation3] sm:$0xff] 0.0
      %70 = vst [vmem:[#allocation4] sm:$0xff] 0.0
    $region33: #{tpu_custom_call.1} parent=1 // pred_fallthru
      _
    %v71 = vld [vmem:[#allocation5] sm:$0xff]
    %v72 = vld [vmem:[#allocation5 + $0x8] sm:$0xff]
    %v73 = vld [vmem:[#allocation5 + $0x10] sm:$0xff]
    %v74 = vld [vmem:[#allocation5 + $0x18] sm:$0xff]
    %v75 = vld [vmem:[#allocation3] sm:$0xff]
    %v76 = vld [vmem:[#allocation8] sm:$0xff]
    %v77 = vld [vmem:[#allocation8 + $0x8] sm:$0xff]
    %v78 = vld [vmem:[#allocation8 + $0x10] sm:$0xff]
    %v79 = vld [vmem:[#allocation8 + $0x18] sm:$0xff]
    %v80 = vld [vmem:[#allocation8 + $0x20] sm:$0xff]
    %v81 = vld [vmem:[#allocation8 + $0x28] sm:$0xff]
    %v82 = vld [vmem:[#allocation8 + $0x30] sm:$0xff]
    %v83 = vld [vmem:[#allocation8 + $0x38] sm:$0xff]
    %v84 = vld [vmem:[#allocation8 + $0x40] sm:$0xff]
    %v85 = vld [vmem:[#allocation8 + $0x48] sm:$0xff]
    %v86 = vld [vmem:[#allocation8 + $0x50] sm:$0xff]
    %v87 = vld [vmem:[#allocation8 + $0x58] sm:$0xff]
    %v88 = vld [vmem:[#allocation8 + $0x60] sm:$0xff]
    %v89 = vld [vmem:[#allocation8 + $0x68] sm:$0xff]
    %v90 = vld [vmem:[#allocation8 + $0x70] sm:$0xff]
    %v91 = vld [vmem:[#allocation8 + $0x78] sm:$0xff]
    %v92 = vld [vmem:[#allocation8 + $0x80] sm:$0xff]
    %v93 = vld [vmem:[#allocation8 + $0x88] sm:$0xff]
    %v94 = vld [vmem:[#allocation8 + $0x90] sm:$0xff]
    %v95 = vld [vmem:[#allocation8 + $0x98] sm:$0xff]
    %v96 = vld [vmem:[#allocation8 + $0xa0] sm:$0xff]
    %v97 = vld [vmem:[#allocation8 + $0xa8] sm:$0xff]
    %v98 = vld [vmem:[#allocation8 + $0xb0] sm:$0xff]
    %v99 = vld [vmem:[#allocation8 + $0xb8] sm:$0xff]
    %v100 = vld [vmem:[#allocation8 + $0xc0] sm:$0xff]
    %v101 = vld [vmem:[#allocation8 + $0xc8] sm:$0xff]
    %v102 = vld [vmem:[#allocation8 + $0xd0] sm:$0xff]
    %v103 = vld [vmem:[#allocation8 + $0xd8] sm:$0xff]
    %v104 = vld [vmem:[#allocation8 + $0xe0] sm:$0xff]
    %v105 = vld [vmem:[#allocation8 + $0xe8] sm:$0xff]
    %v106 = vld [vmem:[#allocation8 + $0xf0] sm:$0xff]
    %v107 = vld [vmem:[#allocation8 + $0xf8] sm:$0xff]
    %v108 = vld [vmem:[#allocation8 + $0x100] sm:$0xff]
    %v109 = vld [vmem:[#allocation8 + $0x108] sm:$0xff]
    %v110 = vld [vmem:[#allocation8 + $0x110] sm:$0xff]
    %v111 = vld [vmem:[#allocation8 + $0x118] sm:$0xff]
    %v112 = vld [vmem:[#allocation8 + $0x120] sm:$0xff]
    %v113 = vld [vmem:[#allocation8 + $0x128] sm:$0xff]
    %v114 = vld [vmem:[#allocation8 + $0x130] sm:$0xff]
    %v115 = vld [vmem:[#allocation8 + $0x138] sm:$0xff]
    %v116 = vld [vmem:[#allocation8 + $0x140] sm:$0xff]
    %v117 = vld [vmem:[#allocation8 + $0x148] sm:$0xff]
    %v118 = vld [vmem:[#allocation8 + $0x150] sm:$0xff]
    %v119 = vld [vmem:[#allocation8 + $0x158] sm:$0xff]
    %v120 = vld [vmem:[#allocation8 + $0x160] sm:$0xff]
    %v121 = vld [vmem:[#allocation8 + $0x168] sm:$0xff]
    %v122 = vld [vmem:[#allocation8 + $0x170] sm:$0xff]
    %v123 = vld [vmem:[#allocation8 + $0x178] sm:$0xff]
    %v124 = vld [vmem:[#allocation8 + $0x180] sm:$0xff]
    %v125 = vld [vmem:[#allocation8 + $0x188] sm:$0xff]
    %v126 = vld [vmem:[#allocation8 + $0x190] sm:$0xff]
    %v127 = vld [vmem:[#allocation8 + $0x198] sm:$0xff]
    %v128 = vld [vmem:[#allocation8 + $0x1a0] sm:$0xff]
    %v129 = vld [vmem:[#allocation8 + $0x1a8] sm:$0xff]
    %v130 = vld [vmem:[#allocation8 + $0x1b0] sm:$0xff]
    %v131 = vld [vmem:[#allocation8 + $0x1b8] sm:$0xff]
    %v132 = vld [vmem:[#allocation8 + $0x1c0] sm:$0xff]
    %v133 = vld [vmem:[#allocation8 + $0x1c8] sm:$0xff]
    %v134 = vld [vmem:[#allocation8 + $0x1d0] sm:$0xff]
    %v135 = vld [vmem:[#allocation8 + $0x1d8] sm:$0xff]
    %v136 = vld [vmem:[#allocation8 + $0x1e0] sm:$0xff]
    %v137 = vld [vmem:[#allocation8 + $0x1e8] sm:$0xff]
    %v138 = vld [vmem:[#allocation8 + $0x1f0] sm:$0xff]
    %v139 = vld [vmem:[#allocation8 + $0x1f8] sm:$0xff]
    %140 = vmatpush.msra.mxu0 %v136
    %141 = vmatpush.msra.mxu0 %v132
    %142 = vmatpush.msra.mxu0 %v128
    %143 = vmatpush.msra.mxu0 %v124
    %144 = vmatpush.msra.mxu0 %v120
    %145 = vmatpush.msra.mxu0 %v116
    %146 = vmatpush.msra.mxu0 %v112
    %147 = vmatpush.msra.mxu0 %v108
    %148 = vmatpush.msra.mxu0 %v104
    %149 = vmatpush.msra.mxu0 %v100
    %150 = vmatpush.msra.mxu0 %v96
    %151 = vmatpush.msra.mxu0 %v92
    %152 = vmatpush.msra.mxu0 %v88
    %153 = vmatpush.msra.mxu0 %v84
    %154 = vmatpush.msra.mxu0 %v80
    %155 = vmatpush.msra.mxu0 %v76
    %156 = vmatmul.f32.gmra.mxu0 %v75
    %v157 = vpop.f32.mrf.mxu0
    %v158 = vadd.f32 0.0, %v157
    %159 = vdwg.mxu0
    %160 = vmatpush.msra.mxu0 %v137
    %161 = vmatpush.msra.mxu0 %v133
    %162 = vmatpush.msra.mxu0 %v129
    %163 = vmatpush.msra.mxu0 %v125
    %164 = vmatpush.msra.mxu0 %v121
    %165 = vmatpush.msra.mxu0 %v117
    %166 = vmatpush.msra.mxu0 %v113
    %167 = vmatpush.msra.mxu0 %v109
    %168 = vmatpush.msra.mxu0 %v105
    %169 = vmatpush.msra.mxu0 %v101
    %170 = vmatpush.msra.mxu0 %v97
    %171 = vmatpush.msra.mxu0 %v93
    %172 = vmatpush.msra.mxu0 %v89
    %173 = vmatpush.msra.mxu0 %v85
    %174 = vmatpush.msra.mxu0 %v81
    %175 = vmatpush.msra.mxu0 %v77
    %176 = vmatmul.f32.gmra.mxu0 %v75
    %v177 = vpop.f32.mrf.mxu0
    %v178 = vadd.f32 0.0, %v177
    %179 = vdwg.mxu0
    %180 = vmatpush.msra.mxu0 %v138
    %181 = vmatpush.msra.mxu0 %v134
    %182 = vmatpush.msra.mxu0 %v130
    %183 = vmatpush.msra.mxu0 %v126
    %184 = vmatpush.msra.mxu0 %v122
    %185 = vmatpush.msra.mxu0 %v118
    %186 = vmatpush.msra.mxu0 %v114
    %187 = vmatpush.msra.mxu0 %v110
    %188 = vmatpush.msra.mxu0 %v106
    %189 = vmatpush.msra.mxu0 %v102
    %190 = vmatpush.msra.mxu0 %v98
    %191 = vmatpush.msra.mxu0 %v94
    %192 = vmatpush.msra.mxu0 %v90
    %193 = vmatpush.msra.mxu0 %v86
    %194 = vmatpush.msra.mxu0 %v82
    %195 = vmatpush.msra.mxu0 %v78
    %196 = vmatmul.f32.gmra.mxu0 %v75
    %v197 = vpop.f32.mrf.mxu0
    %v198 = vadd.f32 0.0, %v197
    %199 = vdwg.mxu0
    %200 = vmatpush.msra.mxu0 %v139
    %201 = vmatpush.msra.mxu0 %v135
    %202 = vmatpush.msra.mxu0 %v131
    %203 = vmatpush.msra.mxu0 %v127
    %204 = vmatpush.msra.mxu0 %v123
    %205 = vmatpush.msra.mxu0 %v119
    %206 = vmatpush.msra.mxu0 %v115
    %207 = vmatpush.msra.mxu0 %v111
    %208 = vmatpush.msra.mxu0 %v107
    %209 = vmatpush.msra.mxu0 %v103
    %210 = vmatpush.msra.mxu0 %v99
    %211 = vmatpush.msra.mxu0 %v95
    %212 = vmatpush.msra.mxu0 %v91
    %213 = vmatpush.msra.mxu0 %v87
    %214 = vmatpush.msra.mxu0 %v83
    %215 = vmatpush.msra.mxu0 %v79
    %216 = vmatmul.f32.gmra.mxu0 %v75
    %v217 = vpop.f32.mrf.mxu0
    %v218 = vadd.f32 0.0, %v217
    %219 = vdwg.mxu0
    %v220 = vadd.f32 %v71, %v158
    %v221 = vadd.f32 %v72, %v178
    %v222 = vadd.f32 %v73, %v198
    %v223 = vadd.f32 %v74, %v218
    %v224 = vxor.u32 %v220, 2147483648
    %v225 = vmul.f32 %v224, 1.442695
    %v226 = vpow.pop %v225
    %v227 = vadd.f32 %v226, 1.0
    %v228 = vrcp.pop %v227
    %v229 = vmul.f32 %v227, %v228
    %v230 = vsub.f32 1.0, %v229
    %v231 = vmul.f32 %v228, %v230
    %v232 = vadd.f32 %v228, %v231
    %vm233 = vweird.f32 %v227
    %vm234 = vweird.f32 %v228
    %vm235 = vmor %vm233, %vm234
    %v236 = vsel %vm235, %v228, %v232
    %v237 = vand.u32 2147483647, %v227
    %vm238 = vcmp.eq.f32.partialorder %v237, 8.507059e+37
    %v239 = vand.u32 %v227, 2147483648
    %v240 = vor.u32 1.1754944e-38, %v239
    %v241 = vsel %vm238, %v240, %v236
    %v242 = vmul.f32 1.0, %v241
    %v243 = vxor.u32 %v221, 2147483648
    %v244 = vmul.f32 %v243, 1.442695
    %v245 = vpow.pop %v244
    %v246 = vadd.f32 %v245, 1.0
    %v247 = vrcp.pop %v246
    %v248 = vmul.f32 %v246, %v247
    %v249 = vsub.f32 1.0, %v248
    %v250 = vmul.f32 %v247, %v249
    %v251 = vadd.f32 %v247, %v250
    %vm252 = vweird.f32 %v246
    %vm253 = vweird.f32 %v247
    %vm254 = vmor %vm252, %vm253
    %v255 = vsel %vm254, %v247, %v251
    %v256 = vand.u32 2147483647, %v246
    %vm257 = vcmp.eq.f32.partialorder %v256, 8.507059e+37
    %v258 = vand.u32 %v246, 2147483648
    %v259 = vor.u32 1.1754944e-38, %v258
    %v260 = vsel %vm257, %v259, %v255
    %v261 = vmul.f32 1.0, %v260
    %v262 = vtanh.pop %v222
    %v263 = vxor.u32 %v223, 2147483648
    %v264 = vmul.f32 %v263, 1.442695
    %v265 = vpow.pop %v264
    %v266 = vadd.f32 %v265, 1.0
    %v267 = vrcp.pop %v266
    %v268 = vmul.f32 %v266, %v267
    %v269 = vsub.f32 1.0, %v268
    %v270 = vmul.f32 %v267, %v269
    %v271 = vadd.f32 %v267, %v270
    %vm272 = vweird.f32 %v266
    %vm273 = vweird.f32 %v267
    %vm274 = vmor %vm272, %vm273
    %v275 = vsel %vm274, %v267, %v271
    %v276 = vand.u32 2147483647, %v266
    %vm277 = vcmp.eq.f32.partialorder %v276, 8.507059e+37
    %v278 = vand.u32 %v266, 2147483648
    %v279 = vor.u32 1.1754944e-38, %v278
    %v280 = vsel %vm277, %v279, %v275
    %v281 = vmul.f32 1.0, %v280
    %v282 = vld [vmem:[#allocation4] sm:$0xff]
    %v283 = vmul.f32 %v261, %v282
    %v284 = vmul.f32 %v242, %v262
    %v285 = vadd.f32 %v283, %v284
    %v286 = vtanh.pop %v285
    %v287 = vmul.f32 %v281, %v286
    %288 = vst [vmem:[#allocation3] sm:$0xff] %v287
    %289 = vst [vmem:[#allocation4] sm:$0xff] %v285
    %290 = vst [vmem:[#allocation2] sm:$0xff] %v287
    %s291 = scalar_lea.vmem [#allocation5], 32
    %v292 = vld [vmem:[%s291] sm:$0xff]
    %v293 = vld [vmem:[%s291 + $0x8] sm:$0xff]
    %v294 = vld [vmem:[%s291 + $0x10] sm:$0xff]
    %v295 = vld [vmem:[%s291 + $0x18] sm:$0xff]
    %v296 = vld [vmem:[#allocation3] sm:$0xff]
    %v297 = vld [vmem:[#allocation8] sm:$0xff]
    %v298 = vld [vmem:[#allocation8 + $0x8] sm:$0xff]
    %v299 = vld [vmem:[#allocation8 + $0x10] sm:$0xff]
    %v300 = vld [vmem:[#allocation8 + $0x18] sm:$0xff]
    %v301 = vld [vmem:[#allocation8 + $0x20] sm:$0xff]
    %v302 = vld [vmem:[#allocation8 + $0x28] sm:$0xff]
    %v303 = vld [vmem:[#allocation8 + $0x30] sm:$0xff]
    %v304 = vld [vmem:[#allocation8 + $0x38] sm:$0xff]
    %v305 = vld [vmem:[#allocation8 + $0x40] sm:$0xff]
    %v306 = vld [vmem:[#allocation8 + $0x48] sm:$0xff]
    %v307 = vld [vmem:[#allocation8 + $0x50] sm:$0xff]
    %v308 = vld [vmem:[#allocation8 + $0x58] sm:$0xff]
    %v309 = vld [vmem:[#allocation8 + $0x60] sm:$0xff]
    %v310 = vld [vmem:[#allocation8 + $0x68] sm:$0xff]
    %v311 = vld [vmem:[#allocation8 + $0x70] sm:$0xff]
    %v312 = vld [vmem:[#allocation8 + $0x78] sm:$0xff]
    %v313 = vld [vmem:[#allocation8 + $0x80] sm:$0xff]
    %v314 = vld [vmem:[#allocation8 + $0x88] sm:$0xff]
    %v315 = vld [vmem:[#allocation8 + $0x90] sm:$0xff]
    %v316 = vld [vmem:[#allocation8 + $0x98] sm:$0xff]
    %v317 = vld [vmem:[#allocation8 + $0xa0] sm:$0xff]
    %v318 = vld [vmem:[#allocation8 + $0xa8] sm:$0xff]
    %v319 = vld [vmem:[#allocation8 + $0xb0] sm:$0xff]
    %v320 = vld [vmem:[#allocation8 + $0xb8] sm:$0xff]
    %v321 = vld [vmem:[#allocation8 + $0xc0] sm:$0xff]
    %v322 = vld [vmem:[#allocation8 + $0xc8] sm:$0xff]
    %v323 = vld [vmem:[#allocation8 + $0xd0] sm:$0xff]
    %v324 = vld [vmem:[#allocation8 + $0xd8] sm:$0xff]
    %v325 = vld [vmem:[#allocation8 + $0xe0] sm:$0xff]
    %v326 = vld [vmem:[#allocation8 + $0xe8] sm:$0xff]
    %v327 = vld [vmem:[#allocation8 + $0xf0] sm:$0xff]
    %v328 = vld [vmem:[#allocation8 + $0xf8] sm:$0xff]
    %v329 = vld [vmem:[#allocation8 + $0x100] sm:$0xff]
    %v330 = vld [vmem:[#allocation8 + $0x108] sm:$0xff]
    %v331 = vld [vmem:[#allocation8 + $0x110] sm:$0xff]
    %v332 = vld [vmem:[#allocation8 + $0x118] sm:$0xff]
    %v333 = vld [vmem:[#allocation8 + $0x120] sm:$0xff]
    %v334 = vld [vmem:[#allocation8 + $0x128] sm:$0xff]
    %v335 = vld [vmem:[#allocation8 + $0x130] sm:$0xff]
    %v336 = vld [vmem:[#allocation8 + $0x138] sm:$0xff]
    %v337 = vld [vmem:[#allocation8 + $0x140] sm:$0xff]
    %v338 = vld [vmem:[#allocation8 + $0x148] sm:$0xff]
    %v339 = vld [vmem:[#allocation8 + $0x150] sm:$0xff]
    %v340 = vld [vmem:[#allocation8 + $0x158] sm:$0xff]
    %v341 = vld [vmem:[#allocation8 + $0x160] sm:$0xff]
    %v342 = vld [vmem:[#allocation8 + $0x168] sm:$0xff]
    %v343 = vld [vmem:[#allocation8 + $0x170] sm:$0xff]
    %v344 = vld [vmem:[#allocation8 + $0x178] sm:$0xff]
    %v345 = vld [vmem:[#allocation8 + $0x180] sm:$0xff]
    %v346 = vld [vmem:[#allocation8 + $0x188] sm:$0xff]
    %v347 = vld [vmem:[#allocation8 + $0x190] sm:$0xff]
    %v348 = vld [vmem:[#allocation8 + $0x198] sm:$0xff]
    %v349 = vld [vmem:[#allocation8 + $0x1a0] sm:$0xff]
    %v350 = vld [vmem:[#allocation8 + $0x1a8] sm:$0xff]
    %v351 = vld [vmem:[#allocation8 + $0x1b0] sm:$0xff]
    %v352 = vld [vmem:[#allocation8 + $0x1b8] sm:$0xff]
    %v353 = vld [vmem:[#allocation8 + $0x1c0] sm:$0xff]
    %v354 = vld [vmem:[#allocation8 + $0x1c8] sm:$0xff]
    %v355 = vld [vmem:[#allocation8 + $0x1d0] sm:$0xff]
    %v356 = vld [vmem:[#allocation8 + $0x1d8] sm:$0xff]
    %v357 = vld [vmem:[#allocation8 + $0x1e0] sm:$0xff]
    %v358 = vld [vmem:[#allocation8 + $0x1e8] sm:$0xff]
    %v359 = vld [vmem:[#allocation8 + $0x1f0] sm:$0xff]
    %v360 = vld [vmem:[#allocation8 + $0x1f8] sm:$0xff]
    %361 = vmatpush.msra.mxu0 %v357
    %362 = vmatpush.msra.mxu0 %v353
    %363 = vmatpush.msra.mxu0 %v349
    %364 = vmatpush.msra.mxu0 %v345
    %365 = vmatpush.msra.mxu0 %v341
    %366 = vmatpush.msra.mxu0 %v337
    %367 = vmatpush.msra.mxu0 %v333
    %368 = vmatpush.msra.mxu0 %v329
    %369 = vmatpush.msra.mxu0 %v325
    %370 = vmatpush.msra.mxu0 %v321
    %371 = vmatpush.msra.mxu0 %v317
    %372 = vmatpush.msra.mxu0 %v313
    %373 = vmatpush.msra.mxu0 %v309
    %374 = vmatpush.msra.mxu0 %v305
    %375 = vmatpush.msra.mxu0 %v301
    %376 = vmatpush.msra.mxu0 %v297
    %377 = vmatmul.f32.gmra.mxu0 %v296
    %v378 = vpop.f32.mrf.mxu0
    %v379 = vadd.f32 0.0, %v378
    %380 = vdwg.mxu0
    %381 = vmatpush.msra.mxu0 %v358
    %382 = vmatpush.msra.mxu0 %v354
    %383 = vmatpush.msra.mxu0 %v350
    %384 = vmatpush.msra.mxu0 %v346
    %385 = vmatpush.msra.mxu0 %v342
    %386 = vmatpush.msra.mxu0 %v338
    %387 = vmatpush.msra.mxu0 %v334
    %388 = vmatpush.msra.mxu0 %v330
    %389 = vmatpush.msra.mxu0 %v326
    %390 = vmatpush.msra.mxu0 %v322
    %391 = vmatpush.msra.mxu0 %v318
    %392 = vmatpush.msra.mxu0 %v314
    %393 = vmatpush.msra.mxu0 %v310
    %394 = vmatpush.msra.mxu0 %v306
    %395 = vmatpush.msra.mxu0 %v302
    %396 = vmatpush.msra.mxu0 %v298
    %397 = vmatmul.f32.gmra.mxu0 %v296
    %v398 = vpop.f32.mrf.mxu0
    %v399 = vadd.f32 0.0, %v398
    %400 = vdwg.mxu0
    %401 = vmatpush.msra.mxu0 %v359
    %402 = vmatpush.msra.mxu0 %v355
    %403 = vmatpush.msra.mxu0 %v351
    %404 = vmatpush.msra.mxu0 %v347
    %405 = vmatpush.msra.mxu0 %v343
    %406 = vmatpush.msra.mxu0 %v339
    %407 = vmatpush.msra.mxu0 %v335
    %408 = vmatpush.msra.mxu0 %v331
    %409 = vmatpush.msra.mxu0 %v327
    %410 = vmatpush.msra.mxu0 %v323
    %411 = vmatpush.msra.mxu0 %v319
    %412 = vmatpush.msra.mxu0 %v315
    %413 = vmatpush.msra.mxu0 %v311
    %414 = vmatpush.msra.mxu0 %v307
    %415 = vmatpush.msra.mxu0 %v303
    %416 = vmatpush.msra.mxu0 %v299
    %417 = vmatmul.f32.gmra.mxu0 %v296
    %v418 = vpop.f32.mrf.mxu0
    %v419 = vadd.f32 0.0, %v418
    %420 = vdwg.mxu0
    %421 = vmatpush.msra.mxu0 %v360
    %422 = vmatpush.msra.mxu0 %v356
    %423 = vmatpush.msra.mxu0 %v352
    %424 = vmatpush.msra.mxu0 %v348
    %425 = vmatpush.msra.mxu0 %v344
    %426 = vmatpush.msra.mxu0 %v340
    %427 = vmatpush.msra.mxu0 %v336
    %428 = vmatpush.msra.mxu0 %v332
    %429 = vmatpush.msra.mxu0 %v328
    %430 = vmatpush.msra.mxu0 %v324
    %431 = vmatpush.msra.mxu0 %v320
    %432 = vmatpush.msra.mxu0 %v316
    %433 = vmatpush.msra.mxu0 %v312
    %434 = vmatpush.msra.mxu0 %v308
    %435 = vmatpush.msra.mxu0 %v304
    %436 = vmatpush.msra.mxu0 %v300
    %437 = vmatmul.f32.gmra.mxu0 %v296
    %v438 = vpop.f32.mrf.mxu0
    %v439 = vadd.f32 0.0, %v438
    %440 = vdwg.mxu0
    %v441 = vadd.f32 %v292, %v379
    %v442 = vadd.f32 %v293, %v399
    %v443 = vadd.f32 %v294, %v419
    %v444 = vadd.f32 %v295, %v439
    %v445 = vxor.u32 %v441, 2147483648
    %v446 = vmul.f32 %v445, 1.442695
    %v447 = vpow.pop %v446
    %v448 = vadd.f32 %v447, 1.0
    %v449 = vrcp.pop %v448
    %v450 = vmul.f32 %v448, %v449
    %v451 = vsub.f32 1.0, %v450
    %v452 = vmul.f32 %v449, %v451
    %v453 = vadd.f32 %v449, %v452
    %vm454 = vweird.f32 %v448
    %vm455 = vweird.f32 %v449
    %vm456 = vmor %vm454, %vm455
    %v457 = vsel %vm456, %v449, %v453
    %v458 = vand.u32 2147483647, %v448
    %vm459 = vcmp.eq.f32.partialorder %v458, 8.507059e+37
    %v460 = vand.u32 %v448, 2147483648
    %v461 = vor.u32 1.1754944e-38, %v460
    %v462 = vsel %vm459, %v461, %v457
    %v463 = vmul.f32 1.0, %v462
    %v464 = vxor.u32 %v442, 2147483648
    %v465 = vmul.f32 %v464, 1.442695
    %v466 = vpow.pop %v465
    %v467 = vadd.f32 %v466, 1.0
    %v468 = vrcp.pop %v467
    %v469 = vmul.f32 %v467, %v468
    %v470 = vsub.f32 1.0, %v469
    %v471 = vmul.f32 %v468, %v470
    %v472 = vadd.f32 %v468, %v471
    %vm473 = vweird.f32 %v467
    %vm474 = vweird.f32 %v468
    %vm475 = vmor %vm473, %vm474
    %v476 = vsel %vm475, %v468, %v472
    %v477 = vand.u32 2147483647, %v467
    %vm478 = vcmp.eq.f32.partialorder %v477, 8.507059e+37
    %v479 = vand.u32 %v467, 2147483648
    %v480 = vor.u32 1.1754944e-38, %v479
    %v481 = vsel %vm478, %v480, %v476
    %v482 = vmul.f32 1.0, %v481
    %v483 = vtanh.pop %v443
    %v484 = vxor.u32 %v444, 2147483648
    %v485 = vmul.f32 %v484, 1.442695
    %v486 = vpow.pop %v485
    %v487 = vadd.f32 %v486, 1.0
    %v488 = vrcp.pop %v487
    %v489 = vmul.f32 %v487, %v488
    %v490 = vsub.f32 1.0, %v489
    %v491 = vmul.f32 %v488, %v490
    %v492 = vadd.f32 %v488, %v491
    %vm493 = vweird.f32 %v487
    %vm494 = vweird.f32 %v488
    %vm495 = vmor %vm493, %vm494
    %v496 = vsel %vm495, %v488, %v492
    %v497 = vand.u32 2147483647, %v487
    %vm498 = vcmp.eq.f32.partialorder %v497, 8.507059e+37
    %v499 = vand.u32 %v487, 2147483648
    %v500 = vor.u32 1.1754944e-38, %v499
    %v501 = vsel %vm498, %v500, %v496
    %v502 = vmul.f32 1.0, %v501
    %v503 = vld [vmem:[#allocation4] sm:$0xff]
    %v504 = vmul.f32 %v482, %v503
    %v505 = vmul.f32 %v463, %v483
    %v506 = vadd.f32 %v504, %v505
    %v507 = vtanh.pop %v506
    %v508 = vmul.f32 %v502, %v507
    %509 = vst [vmem:[#allocation3] sm:$0xff] %v508
    %510 = vst [vmem:[#allocation4] sm:$0xff] %v506
    %s511 = scalar_lea.vmem [#allocation2], 8
    %512 = vst [vmem:[%s511] sm:$0xff] %v508
    %s513 = scalar_lea.vmem [#allocation5], 64
    %v514 = vld [vmem:[%s513] sm:$0xff]
    %v515 = vld [vmem:[%s513 + $0x8] sm:$0xff]
    %v516 = vld [vmem:[%s513 + $0x10] sm:$0xff]
    %v517 = vld [vmem:[%s513 + $0x18] sm:$0xff]
    %v518 = vld [vmem:[#allocation3] sm:$0xff]
    %v519 = vld [vmem:[#allocation8] sm:$0xff]
    %v520 = vld [vmem:[#allocation8 + $0x8] sm:$0xff]
    %v521 = vld [vmem:[#allocation8 + $0x10] sm:$0xff]
    %v522 = vld [vmem:[#allocation8 + $0x18] sm:$0xff]
    %v523 = vld [vmem:[#allocation8 + $0x20] sm:$0xff]
    %v524 = vld [vmem:[#allocation8 + $0x28] sm:$0xff]
    %v525 = vld [vmem:[#allocation8 + $0x30] sm:$0xff]
    %v526 = vld [vmem:[#allocation8 + $0x38] sm:$0xff]
    %v527 = vld [vmem:[#allocation8 + $0x40] sm:$0xff]
    %v528 = vld [vmem:[#allocation8 + $0x48] sm:$0xff]
    %v529 = vld [vmem:[#allocation8 + $0x50] sm:$0xff]
    %v530 = vld [vmem:[#allocation8 + $0x58] sm:$0xff]
    %v531 = vld [vmem:[#allocation8 + $0x60] sm:$0xff]
    %v532 = vld [vmem:[#allocation8 + $0x68] sm:$0xff]
    %v533 = vld [vmem:[#allocation8 + $0x70] sm:$0xff]
    %v534 = vld [vmem:[#allocation8 + $0x78] sm:$0xff]
    %v535 = vld [vmem:[#allocation8 + $0x80] sm:$0xff]
    %v536 = vld [vmem:[#allocation8 + $0x88] sm:$0xff]
    %v537 = vld [vmem:[#allocation8 + $0x90] sm:$0xff]
    %v538 = vld [vmem:[#allocation8 + $0x98] sm:$0xff]
    %v539 = vld [vmem:[#allocation8 + $0xa0] sm:$0xff]
    %v540 = vld [vmem:[#allocation8 + $0xa8] sm:$0xff]
    %v541 = vld [vmem:[#allocation8 + $0xb0] sm:$0xff]
    %v542 = vld [vmem:[#allocation8 + $0xb8] sm:$0xff]
    %v543 = vld [vmem:[#allocation8 + $0xc0] sm:$0xff]
    %v544 = vld [vmem:[#allocation8 + $0xc8] sm:$0xff]
    %v545 = vld [vmem:[#allocation8 + $0xd0] sm:$0xff]
    %v546 = vld [vmem:[#allocation8 + $0xd8] sm:$0xff]
    %v547 = vld [vmem:[#allocation8 + $0xe0] sm:$0xff]
    %v548 = vld [vmem:[#allocation8 + $0xe8] sm:$0xff]
    %v549 = vld [vmem:[#allocation8 + $0xf0] sm:$0xff]
    %v550 = vld [vmem:[#allocation8 + $0xf8] sm:$0xff]
    %v551 = vld [vmem:[#allocation8 + $0x100] sm:$0xff]
    %v552 = vld [vmem:[#allocation8 + $0x108] sm:$0xff]
    %v553 = vld [vmem:[#allocation8 + $0x110] sm:$0xff]
    %v554 = vld [vmem:[#allocation8 + $0x118] sm:$0xff]
    %v555 = vld [vmem:[#allocation8 + $0x120] sm:$0xff]
    %v556 = vld [vmem:[#allocation8 + $0x128] sm:$0xff]
    %v557 = vld [vmem:[#allocation8 + $0x130] sm:$0xff]
    %v558 = vld [vmem:[#allocation8 + $0x138] sm:$0xff]
    %v559 = vld [vmem:[#allocation8 + $0x140] sm:$0xff]
    %v560 = vld [vmem:[#allocation8 + $0x148] sm:$0xff]
    %v561 = vld [vmem:[#allocation8 + $0x150] sm:$0xff]
    %v562 = vld [vmem:[#allocation8 + $0x158] sm:$0xff]
    %v563 = vld [vmem:[#allocation8 + $0x160] sm:$0xff]
    %v564 = vld [vmem:[#allocation8 + $0x168] sm:$0xff]
    %v565 = vld [vmem:[#allocation8 + $0x170] sm:$0xff]
    %v566 = vld [vmem:[#allocation8 + $0x178] sm:$0xff]
    %v567 = vld [vmem:[#allocation8 + $0x180] sm:$0xff]
    %v568 = vld [vmem:[#allocation8 + $0x188] sm:$0xff]
    %v569 = vld [vmem:[#allocation8 + $0x190] sm:$0xff]
    %v570 = vld [vmem:[#allocation8 + $0x198] sm:$0xff]
    %v571 = vld [vmem:[#allocation8 + $0x1a0] sm:$0xff]
    %v572 = vld [vmem:[#allocation8 + $0x1a8] sm:$0xff]
    %v573 = vld [vmem:[#allocation8 + $0x1b0] sm:$0xff]
    %v574 = vld [vmem:[#allocation8 + $0x1b8] sm:$0xff]
    %v575 = vld [vmem:[#allocation8 + $0x1c0] sm:$0xff]
    %v576 = vld [vmem:[#allocation8 + $0x1c8] sm:$0xff]
    %v577 = vld [vmem:[#allocation8 + $0x1d0] sm:$0xff]
    %v578 = vld [vmem:[#allocation8 + $0x1d8] sm:$0xff]
    %v579 = vld [vmem:[#allocation8 + $0x1e0] sm:$0xff]
    %v580 = vld [vmem:[#allocation8 + $0x1e8] sm:$0xff]
    %v581 = vld [vmem:[#allocation8 + $0x1f0] sm:$0xff]
    %v582 = vld [vmem:[#allocation8 + $0x1f8] sm:$0xff]
    %583 = vmatpush.msra.mxu0 %v579
    %584 = vmatpush.msra.mxu0 %v575
    %585 = vmatpush.msra.mxu0 %v571
    %586 = vmatpush.msra.mxu0 %v567
    %587 = vmatpush.msra.mxu0 %v563
    %588 = vmatpush.msra.mxu0 %v559
    %589 = vmatpush.msra.mxu0 %v555
    %590 = vmatpush.msra.mxu0 %v551
    %591 = vmatpush.msra.mxu0 %v547
    %592 = vmatpush.msra.mxu0 %v543
    %593 = vmatpush.msra.mxu0 %v539
    %594 = vmatpush.msra.mxu0 %v535
    %595 = vmatpush.msra.mxu0 %v531
    %596 = vmatpush.msra.mxu0 %v527
    %597 = vmatpush.msra.mxu0 %v523
    %598 = vmatpush.msra.mxu0 %v519
    %599 = vmatmul.f32.gmra.mxu0 %v518
    %v600 = vpop.f32.mrf.mxu0
    %v601 = vadd.f32 0.0, %v600
    %602 = vdwg.mxu0
    %603 = vmatpush.msra.mxu0 %v580
    %604 = vmatpush.msra.mxu0 %v576
    %605 = vmatpush.msra.mxu0 %v572
    %606 = vmatpush.msra.mxu0 %v568
    %607 = vmatpush.msra.mxu0 %v564
    %608 = vmatpush.msra.mxu0 %v560
    %609 = vmatpush.msra.mxu0 %v556
    %610 = vmatpush.msra.mxu0 %v552
    %611 = vmatpush.msra.mxu0 %v548
    %612 = vmatpush.msra.mxu0 %v544
    %613 = vmatpush.msra.mxu0 %v540
    %614 = vmatpush.msra.mxu0 %v536
    %615 = vmatpush.msra.mxu0 %v532
    %616 = vmatpush.msra.mxu0 %v528
    %617 = vmatpush.msra.mxu0 %v524
    %618 = vmatpush.msra.mxu0 %v520
    %619 = vmatmul.f32.gmra.mxu0 %v518
    %v620 = vpop.f32.mrf.mxu0
    %v621 = vadd.f32 0.0, %v620
    %622 = vdwg.mxu0
    %623 = vmatpush.msra.mxu0 %v581
    %624 = vmatpush.msra.mxu0 %v577
    %625 = vmatpush.msra.mxu0 %v573
    %626 = vmatpush.msra.mxu0 %v569
    %627 = vmatpush.msra.mxu0 %v565
    %628 = vmatpush.msra.mxu0 %v561
    %629 = vmatpush.msra.mxu0 %v557
    %630 = vmatpush.msra.mxu0 %v553
    %631 = vmatpush.msra.mxu0 %v549
    %632 = vmatpush.msra.mxu0 %v545
    %633 = vmatpush.msra.mxu0 %v541
    %634 = vmatpush.msra.mxu0 %v537
    %635 = vmatpush.msra.mxu0 %v533
    %636 = vmatpush.msra.mxu0 %v529
    %637 = vmatpush.msra.mxu0 %v525
    %638 = vmatpush.msra.mxu0 %v521
    %639 = vmatmul.f32.gmra.mxu0 %v518
    %v640 = vpop.f32.mrf.mxu0
    %v641 = vadd.f32 0.0, %v640
    %642 = vdwg.mxu0
    %643 = vmatpush.msra.mxu0 %v582
    %644 = vmatpush.msra.mxu0 %v578
    %645 = vmatpush.msra.mxu0 %v574
    %646 = vmatpush.msra.mxu0 %v570
    %647 = vmatpush.msra.mxu0 %v566
    %648 = vmatpush.msra.mxu0 %v562
    %649 = vmatpush.msra.mxu0 %v558
    %650 = vmatpush.msra.mxu0 %v554
    %651 = vmatpush.msra.mxu0 %v550
    %652 = vmatpush.msra.mxu0 %v546
    %653 = vmatpush.msra.mxu0 %v542
    %654 = vmatpush.msra.mxu0 %v538
    %655 = vmatpush.msra.mxu0 %v534
    %656 = vmatpush.msra.mxu0 %v530
    %657 = vmatpush.msra.mxu0 %v526
    %658 = vmatpush.msra.mxu0 %v522
    %659 = vmatmul.f32.gmra.mxu0 %v518
    %v660 = vpop.f32.mrf.mxu0
    %v661 = vadd.f32 0.0, %v660
    %662 = vdwg.mxu0
    %v663 = vadd.f32 %v514, %v601
    %v664 = vadd.f32 %v515, %v621
    %v665 = vadd.f32 %v516, %v641
    %v666 = vadd.f32 %v517, %v661
    %v667 = vxor.u32 %v663, 2147483648
    %v668 = vmul.f32 %v667, 1.442695
    %v669 = vpow.pop %v668
    %v670 = vadd.f32 %v669, 1.0
    %v671 = vrcp.pop %v670
    %v672 = vmul.f32 %v670, %v671
    %v673 = vsub.f32 1.0, %v672
    %v674 = vmul.f32 %v671, %v673
    %v675 = vadd.f32 %v671, %v674
    %vm676 = vweird.f32 %v670
    %vm677 = vweird.f32 %v671
    %vm678 = vmor %vm676, %vm677
    %v679 = vsel %vm678, %v671, %v675
    %v680 = vand.u32 2147483647, %v670
    %vm681 = vcmp.eq.f32.partialorder %v680, 8.507059e+37
    %v682 = vand.u32 %v670, 2147483648
    %v683 = vor.u32 1.1754944e-38, %v682
    %v684 = vsel %vm681, %v683, %v679
    %v685 = vmul.f32 1.0, %v684
    %v686 = vxor.u32 %v664, 2147483648
    %v687 = vmul.f32 %v686, 1.442695
    %v688 = vpow.pop %v687
    %v689 = vadd.f32 %v688, 1.0
    %v690 = vrcp.pop %v689
    %v691 = vmul.f32 %v689, %v690
    %v692 = vsub.f32 1.0, %v691
    %v693 = vmul.f32 %v690, %v692
    %v694 = vadd.f32 %v690, %v693
    %vm695 = vweird.f32 %v689
    %vm696 = vweird.f32 %v690
    %vm697 = vmor %vm695, %vm696
    %v698 = vsel %vm697, %v690, %v694
    %v699 = vand.u32 2147483647, %v689
    %vm700 = vcmp.eq.f32.partialorder %v699, 8.507059e+37
    %v701 = vand.u32 %v689, 2147483648
    %v702 = vor.u32 1.1754944e-38, %v701
    %v703 = vsel %vm700, %v702, %v698
    %v704 = vmul.f32 1.0, %v703
    %v705 = vtanh.pop %v665
    %v706 = vxor.u32 %v666, 2147483648
    %v707 = vmul.f32 %v706, 1.442695
    %v708 = vpow.pop %v707
    %v709 = vadd.f32 %v708, 1.0
    %v710 = vrcp.pop %v709
    %v711 = vmul.f32 %v709, %v710
    %v712 = vsub.f32 1.0, %v711
    %v713 = vmul.f32 %v710, %v712
    %v714 = vadd.f32 %v710, %v713
    %vm715 = vweird.f32 %v709
    %vm716 = vweird.f32 %v710
    %vm717 = vmor %vm715, %vm716
    %v718 = vsel %vm717, %v710, %v714
    %v719 = vand.u32 2147483647, %v709
    %vm720 = vcmp.eq.f32.partialorder %v719, 8.507059e+37
    %v721 = vand.u32 %v709, 2147483648
    %v722 = vor.u32 1.1754944e-38, %v721
    %v723 = vsel %vm720, %v722, %v718
    %v724 = vmul.f32 1.0, %v723
    %v725 = vld [vmem:[#allocation4] sm:$0xff]
    %v726 = vmul.f32 %v704, %v725
    %v727 = vmul.f32 %v685, %v705
    %v728 = vadd.f32 %v726, %v727
    %v729 = vtanh.pop %v728
    %v730 = vmul.f32 %v724, %v729
    %731 = vst [vmem:[#allocation3] sm:$0xff] %v730
    %732 = vst [vmem:[#allocation4] sm:$0xff] %v728
    %s733 = scalar_lea.vmem [#allocation2], 16
    %734 = vst [vmem:[%s733] sm:$0xff] %v730
    %s735 = scalar_lea.vmem [#allocation5], 96
    %v736 = vld [vmem:[%s735] sm:$0xff]
    %v737 = vld [vmem:[%s735 + $0x8] sm:$0xff]
    %v738 = vld [vmem:[%s735 + $0x10] sm:$0xff]
    %v739 = vld [vmem:[%s735 + $0x18] sm:$0xff]
    %v740 = vld [vmem:[#allocation3] sm:$0xff]
    %v741 = vld [vmem:[#allocation8] sm:$0xff]
    %v742 = vld [vmem:[#allocation8 + $0x8] sm:$0xff]
    %v743 = vld [vmem:[#allocation8 + $0x10] sm:$0xff]
    %v744 = vld [vmem:[#allocation8 + $0x18] sm:$0xff]
    %v745 = vld [vmem:[#allocation8 + $0x20] sm:$0xff]
    %v746 = vld [vmem:[#allocation8 + $0x28] sm:$0xff]
    %v747 = vld [vmem:[#allocation8 + $0x30] sm:$0xff]
    %v748 = vld [vmem:[#allocation8 + $0x38] sm:$0xff]
    %v749 = vld [vmem:[#allocation8 + $0x40] sm:$0xff]
    %v750 = vld [vmem:[#allocation8 + $0x48] sm:$0xff]
    %v751 = vld [vmem:[#allocation8 + $0x50] sm:$0xff]
    %v752 = vld [vmem:[#allocation8 + $0x58] sm:$0xff]
    %v753 = vld [vmem:[#allocation8 + $0x60] sm:$0xff]
    %v754 = vld [vmem:[#allocation8 + $0x68] sm:$0xff]
    %v755 = vld [vmem:[#allocation8 + $0x70] sm:$0xff]
    %v756 = vld [vmem:[#allocation8 + $0x78] sm:$0xff]
    %v757 = vld [vmem:[#allocation8 + $0x80] sm:$0xff]
    %v758 = vld [vmem:[#allocation8 + $0x88] sm:$0xff]
    %v759 = vld [vmem:[#allocation8 + $0x90] sm:$0xff]
    %v760 = vld [vmem:[#allocation8 + $0x98] sm:$0xff]
    %v761 = vld [vmem:[#allocation8 + $0xa0] sm:$0xff]
    %v762 = vld [vmem:[#allocation8 + $0xa8] sm:$0xff]
    %v763 = vld [vmem:[#allocation8 + $0xb0] sm:$0xff]
    %v764 = vld [vmem:[#allocation8 + $0xb8] sm:$0xff]
    %v765 = vld [vmem:[#allocation8 + $0xc0] sm:$0xff]
    %v766 = vld [vmem:[#allocation8 + $0xc8] sm:$0xff]
    %v767 = vld [vmem:[#allocation8 + $0xd0] sm:$0xff]
    %v768 = vld [vmem:[#allocation8 + $0xd8] sm:$0xff]
    %v769 = vld [vmem:[#allocation8 + $0xe0] sm:$0xff]
    %v770 = vld [vmem:[#allocation8 + $0xe8] sm:$0xff]
    %v771 = vld [vmem:[#allocation8 + $0xf0] sm:$0xff]
    %v772 = vld [vmem:[#allocation8 + $0xf8] sm:$0xff]
    %v773 = vld [vmem:[#allocation8 + $0x100] sm:$0xff]
    %v774 = vld [vmem:[#allocation8 + $0x108] sm:$0xff]
    %v775 = vld [vmem:[#allocation8 + $0x110] sm:$0xff]
    %v776 = vld [vmem:[#allocation8 + $0x118] sm:$0xff]
    %v777 = vld [vmem:[#allocation8 + $0x120] sm:$0xff]
    %v778 = vld [vmem:[#allocation8 + $0x128] sm:$0xff]
    %v779 = vld [vmem:[#allocation8 + $0x130] sm:$0xff]
    %v780 = vld [vmem:[#allocation8 + $0x138] sm:$0xff]
    %v781 = vld [vmem:[#allocation8 + $0x140] sm:$0xff]
    %v782 = vld [vmem:[#allocation8 + $0x148] sm:$0xff]
    %v783 = vld [vmem:[#allocation8 + $0x150] sm:$0xff]
    %v784 = vld [vmem:[#allocation8 + $0x158] sm:$0xff]
    %v785 = vld [vmem:[#allocation8 + $0x160] sm:$0xff]
    %v786 = vld [vmem:[#allocation8 + $0x168] sm:$0xff]
    %v787 = vld [vmem:[#allocation8 + $0x170] sm:$0xff]
    %v788 = vld [vmem:[#allocation8 + $0x178] sm:$0xff]
    %v789 = vld [vmem:[#allocation8 + $0x180] sm:$0xff]
    %v790 = vld [vmem:[#allocation8 + $0x188] sm:$0xff]
    %v791 = vld [vmem:[#allocation8 + $0x190] sm:$0xff]
    %v792 = vld [vmem:[#allocation8 + $0x198] sm:$0xff]
    %v793 = vld [vmem:[#allocation8 + $0x1a0] sm:$0xff]
    %v794 = vld [vmem:[#allocation8 + $0x1a8] sm:$0xff]
    %v795 = vld [vmem:[#allocation8 + $0x1b0] sm:$0xff]
    %v796 = vld [vmem:[#allocation8 + $0x1b8] sm:$0xff]
    %v797 = vld [vmem:[#allocation8 + $0x1c0] sm:$0xff]
    %v798 = vld [vmem:[#allocation8 + $0x1c8] sm:$0xff]
    %v799 = vld [vmem:[#allocation8 + $0x1d0] sm:$0xff]
    %v800 = vld [vmem:[#allocation8 + $0x1d8] sm:$0xff]
    %v801 = vld [vmem:[#allocation8 + $0x1e0] sm:$0xff]
    %v802 = vld [vmem:[#allocation8 + $0x1e8] sm:$0xff]
    %v803 = vld [vmem:[#allocation8 + $0x1f0] sm:$0xff]
    %v804 = vld [vmem:[#allocation8 + $0x1f8] sm:$0xff]
    %805 = vmatpush.msra.mxu0 %v801
    %806 = vmatpush.msra.mxu0 %v797
    %807 = vmatpush.msra.mxu0 %v793
    %808 = vmatpush.msra.mxu0 %v789
    %809 = vmatpush.msra.mxu0 %v785
    %810 = vmatpush.msra.mxu0 %v781
    %811 = vmatpush.msra.mxu0 %v777
    %812 = vmatpush.msra.mxu0 %v773
    %813 = vmatpush.msra.mxu0 %v769
    %814 = vmatpush.msra.mxu0 %v765
    %815 = vmatpush.msra.mxu0 %v761
    %816 = vmatpush.msra.mxu0 %v757
    %817 = vmatpush.msra.mxu0 %v753
    %818 = vmatpush.msra.mxu0 %v749
    %819 = vmatpush.msra.mxu0 %v745
    %820 = vmatpush.msra.mxu0 %v741
    %821 = vmatmul.f32.gmra.mxu0 %v740
    %v822 = vpop.f32.mrf.mxu0
    %v823 = vadd.f32 0.0, %v822
    %824 = vdwg.mxu0
    %825 = vmatpush.msra.mxu0 %v802
    %826 = vmatpush.msra.mxu0 %v798
    %827 = vmatpush.msra.mxu0 %v794
    %828 = vmatpush.msra.mxu0 %v790
    %829 = vmatpush.msra.mxu0 %v786
    %830 = vmatpush.msra.mxu0 %v782
    %831 = vmatpush.msra.mxu0 %v778
    %832 = vmatpush.msra.mxu0 %v774
    %833 = vmatpush.msra.mxu0 %v770
    %834 = vmatpush.msra.mxu0 %v766
    %835 = vmatpush.msra.mxu0 %v762
    %836 = vmatpush.msra.mxu0 %v758
    %837 = vmatpush.msra.mxu0 %v754
    %838 = vmatpush.msra.mxu0 %v750
    %839 = vmatpush.msra.mxu0 %v746
    %840 = vmatpush.msra.mxu0 %v742
    %841 = vmatmul.f32.gmra.mxu0 %v740
    %v842 = vpop.f32.mrf.mxu0
    %v843 = vadd.f32 0.0, %v842
    %844 = vdwg.mxu0
    %845 = vmatpush.msra.mxu0 %v803
    %846 = vmatpush.msra.mxu0 %v799
    %847 = vmatpush.msra.mxu0 %v795
    %848 = vmatpush.msra.mxu0 %v791
    %849 = vmatpush.msra.mxu0 %v787
    %850 = vmatpush.msra.mxu0 %v783
    %851 = vmatpush.msra.mxu0 %v779
    %852 = vmatpush.msra.mxu0 %v775
    %853 = vmatpush.msra.mxu0 %v771
    %854 = vmatpush.msra.mxu0 %v767
    %855 = vmatpush.msra.mxu0 %v763
    %856 = vmatpush.msra.mxu0 %v759
    %857 = vmatpush.msra.mxu0 %v755
    %858 = vmatpush.msra.mxu0 %v751
    %859 = vmatpush.msra.mxu0 %v747
    %860 = vmatpush.msra.mxu0 %v743
    %861 = vmatmul.f32.gmra.mxu0 %v740
    %v862 = vpop.f32.mrf.mxu0
    %v863 = vadd.f32 0.0, %v862
    %864 = vdwg.mxu0
    %865 = vmatpush.msra.mxu0 %v804
    %866 = vmatpush.msra.mxu0 %v800
    %867 = vmatpush.msra.mxu0 %v796
    %868 = vmatpush.msra.mxu0 %v792
    %869 = vmatpush.msra.mxu0 %v788
    %870 = vmatpush.msra.mxu0 %v784
    %871 = vmatpush.msra.mxu0 %v780
    %872 = vmatpush.msra.mxu0 %v776
    %873 = vmatpush.msra.mxu0 %v772
    %874 = vmatpush.msra.mxu0 %v768
    %875 = vmatpush.msra.mxu0 %v764
    %876 = vmatpush.msra.mxu0 %v760
    %877 = vmatpush.msra.mxu0 %v756
    %878 = vmatpush.msra.mxu0 %v752
    %879 = vmatpush.msra.mxu0 %v748
    %880 = vmatpush.msra.mxu0 %v744
    %881 = vmatmul.f32.gmra.mxu0 %v740
    %v882 = vpop.f32.mrf.mxu0
    %v883 = vadd.f32 0.0, %v882
    %884 = vdwg.mxu0
    %v885 = vadd.f32 %v736, %v823
    %v886 = vadd.f32 %v737, %v843
    %v887 = vadd.f32 %v738, %v863
    %v888 = vadd.f32 %v739, %v883
    %v889 = vxor.u32 %v885, 2147483648
    %v890 = vmul.f32 %v889, 1.442695
    %v891 = vpow.pop %v890
    %v892 = vadd.f32 %v891, 1.0
    %v893 = vrcp.pop %v892
    %v894 = vmul.f32 %v892, %v893
    %v895 = vsub.f32 1.0, %v894
    %v896 = vmul.f32 %v893, %v895
    %v897 = vadd.f32 %v893, %v896
    %vm898 = vweird.f32 %v892
    %vm899 = vweird.f32 %v893
    %vm900 = vmor %vm898, %vm899
    %v901 = vsel %vm900, %v893, %v897
    %v902 = vand.u32 2147483647, %v892
    %vm903 = vcmp.eq.f32.partialorder %v902, 8.507059e+37
    %v904 = vand.u32 %v892, 2147483648
    %v905 = vor.u32 1.1754944e-38, %v904
    %v906 = vsel %vm903, %v905, %v901
    %v907 = vmul.f32 1.0, %v906
    %v908 = vxor.u32 %v886, 2147483648
    %v909 = vmul.f32 %v908, 1.442695
    %v910 = vpow.pop %v909
    %v911 = vadd.f32 %v910, 1.0
    %v912 = vrcp.pop %v911
    %v913 = vmul.f32 %v911, %v912
    %v914 = vsub.f32 1.0, %v913
    %v915 = vmul.f32 %v912, %v914
    %v916 = vadd.f32 %v912, %v915
    %vm917 = vweird.f32 %v911
    %vm918 = vweird.f32 %v912
    %vm919 = vmor %vm917, %vm918
    %v920 = vsel %vm919, %v912, %v916
    %v921 = vand.u32 2147483647, %v911
    %vm922 = vcmp.eq.f32.partialorder %v921, 8.507059e+37
    %v923 = vand.u32 %v911, 2147483648
    %v924 = vor.u32 1.1754944e-38, %v923
    %v925 = vsel %vm922, %v924, %v920
    %v926 = vmul.f32 1.0, %v925
    %v927 = vtanh.pop %v887
    %v928 = vxor.u32 %v888, 2147483648
    %v929 = vmul.f32 %v928, 1.442695
    %v930 = vpow.pop %v929
    %v931 = vadd.f32 %v930, 1.0
    %v932 = vrcp.pop %v931
    %v933 = vmul.f32 %v931, %v932
    %v934 = vsub.f32 1.0, %v933
    %v935 = vmul.f32 %v932, %v934
    %v936 = vadd.f32 %v932, %v935
    %vm937 = vweird.f32 %v931
    %vm938 = vweird.f32 %v932
    %vm939 = vmor %vm937, %vm938
    %v940 = vsel %vm939, %v932, %v936
    %v941 = vand.u32 2147483647, %v931
    %vm942 = vcmp.eq.f32.partialorder %v941, 8.507059e+37
    %v943 = vand.u32 %v931, 2147483648
    %v944 = vor.u32 1.1754944e-38, %v943
    %v945 = vsel %vm942, %v944, %v940
    %v946 = vmul.f32 1.0, %v945
    %v947 = vld [vmem:[#allocation4] sm:$0xff]
    %v948 = vmul.f32 %v926, %v947
    %v949 = vmul.f32 %v907, %v927
    %v950 = vadd.f32 %v948, %v949
    %v951 = vtanh.pop %v950
    %v952 = vmul.f32 %v946, %v951
    %953 = vst [vmem:[#allocation3] sm:$0xff] %v952
    %954 = vst [vmem:[#allocation4] sm:$0xff] %v950
    %s955 = scalar_lea.vmem [#allocation2], 24
    %956 = vst [vmem:[%s955] sm:$0xff] %v952
    %s957 = scalar_lea.vmem [#allocation5], 128
    %v958 = vld [vmem:[%s957] sm:$0xff]
    %v959 = vld [vmem:[%s957 + $0x8] sm:$0xff]
    %v960 = vld [vmem:[%s957 + $0x10] sm:$0xff]
    %v961 = vld [vmem:[%s957 + $0x18] sm:$0xff]
    %v962 = vld [vmem:[#allocation3] sm:$0xff]
    %v963 = vld [vmem:[#allocation8] sm:$0xff]
    %v964 = vld [vmem:[#allocation8 + $0x8] sm:$0xff]
    %v965 = vld [vmem:[#allocation8 + $0x10] sm:$0xff]
    %v966 = vld [vmem:[#allocation8 + $0x18] sm:$0xff]
    %v967 = vld [vmem:[#allocation8 + $0x20] sm:$0xff]
    %v968 = vld [vmem:[#allocation8 + $0x28] sm:$0xff]
    %v969 = vld [vmem:[#allocation8 + $0x30] sm:$0xff]
    %v970 = vld [vmem:[#allocation8 + $0x38] sm:$0xff]
    %v971 = vld [vmem:[#allocation8 + $0x40] sm:$0xff]
    %v972 = vld [vmem:[#allocation8 + $0x48] sm:$0xff]
    %v973 = vld [vmem:[#allocation8 + $0x50] sm:$0xff]
    %v974 = vld [vmem:[#allocation8 + $0x58] sm:$0xff]
    %v975 = vld [vmem:[#allocation8 + $0x60] sm:$0xff]
    %v976 = vld [vmem:[#allocation8 + $0x68] sm:$0xff]
    %v977 = vld [vmem:[#allocation8 + $0x70] sm:$0xff]
    %v978 = vld [vmem:[#allocation8 + $0x78] sm:$0xff]
    %v979 = vld [vmem:[#allocation8 + $0x80] sm:$0xff]
    %v980 = vld [vmem:[#allocation8 + $0x88] sm:$0xff]
    %v981 = vld [vmem:[#allocation8 + $0x90] sm:$0xff]
    %v982 = vld [vmem:[#allocation8 + $0x98] sm:$0xff]
    %v983 = vld [vmem:[#allocation8 + $0xa0] sm:$0xff]
    %v984 = vld [vmem:[#allocation8 + $0xa8] sm:$0xff]
    %v985 = vld [vmem:[#allocation8 + $0xb0] sm:$0xff]
    %v986 = vld [vmem:[#allocation8 + $0xb8] sm:$0xff]
    %v987 = vld [vmem:[#allocation8 + $0xc0] sm:$0xff]
    %v988 = vld [vmem:[#allocation8 + $0xc8] sm:$0xff]
    %v989 = vld [vmem:[#allocation8 + $0xd0] sm:$0xff]
    %v990 = vld [vmem:[#allocation8 + $0xd8] sm:$0xff]
    %v991 = vld [vmem:[#allocation8 + $0xe0] sm:$0xff]
    %v992 = vld [vmem:[#allocation8 + $0xe8] sm:$0xff]
    %v993 = vld [vmem:[#allocation8 + $0xf0] sm:$0xff]
    %v994 = vld [vmem:[#allocation8 + $0xf8] sm:$0xff]
    %v995 = vld [vmem:[#allocation8 + $0x100] sm:$0xff]
    %v996 = vld [vmem:[#allocation8 + $0x108] sm:$0xff]
    %v997 = vld [vmem:[#allocation8 + $0x110] sm:$0xff]
    %v998 = vld [vmem:[#allocation8 + $0x118] sm:$0xff]
    %v999 = vld [vmem:[#allocation8 + $0x120] sm:$0xff]
    %v1000 = vld [vmem:[#allocation8 + $0x128] sm:$0xff]
    %v1001 = vld [vmem:[#allocation8 + $0x130] sm:$0xff]
    %v1002 = vld [vmem:[#allocation8 + $0x138] sm:$0xff]
    %v1003 = vld [vmem:[#allocation8 + $0x140] sm:$0xff]
    %v1004 = vld [vmem:[#allocation8 + $0x148] sm:$0xff]
    %v1005 = vld [vmem:[#allocation8 + $0x150] sm:$0xff]
    %v1006 = vld [vmem:[#allocation8 + $0x158] sm:$0xff]
    %v1007 = vld [vmem:[#allocation8 + $0x160] sm:$0xff]
    %v1008 = vld [vmem:[#allocation8 + $0x168] sm:$0xff]
    %v1009 = vld [vmem:[#allocation8 + $0x170] sm:$0xff]
    %v1010 = vld [vmem:[#allocation8 + $0x178] sm:$0xff]
    %v1011 = vld [vmem:[#allocation8 + $0x180] sm:$0xff]
    %v1012 = vld [vmem:[#allocation8 + $0x188] sm:$0xff]
    %v1013 = vld [vmem:[#allocation8 + $0x190] sm:$0xff]
    %v1014 = vld [vmem:[#allocation8 + $0x198] sm:$0xff]
    %v1015 = vld [vmem:[#allocation8 + $0x1a0] sm:$0xff]
    %v1016 = vld [vmem:[#allocation8 + $0x1a8] sm:$0xff]
    %v1017 = vld [vmem:[#allocation8 + $0x1b0] sm:$0xff]
    %v1018 = vld [vmem:[#allocation8 + $0x1b8] sm:$0xff]
    %v1019 = vld [vmem:[#allocation8 + $0x1c0] sm:$0xff]
    %v1020 = vld [vmem:[#allocation8 + $0x1c8] sm:$0xff]
    %v1021 = vld [vmem:[#allocation8 + $0x1d0] sm:$0xff]
    %v1022 = vld [vmem:[#allocation8 + $0x1d8] sm:$0xff]
    %v1023 = vld [vmem:[#allocation8 + $0x1e0] sm:$0xff]
    %v1024 = vld [vmem:[#allocation8 + $0x1e8] sm:$0xff]
    %v1025 = vld [vmem:[#allocation8 + $0x1f0] sm:$0xff]
    %v1026 = vld [vmem:[#allocation8 + $0x1f8] sm:$0xff]
    %1027 = vmatpush.msra.mxu0 %v1023
    %1028 = vmatpush.msra.mxu0 %v1019
    %1029 = vmatpush.msra.mxu0 %v1015
    %1030 = vmatpush.msra.mxu0 %v1011
    %1031 = vmatpush.msra.mxu0 %v1007
    %1032 = vmatpush.msra.mxu0 %v1003
    %1033 = vmatpush.msra.mxu0 %v999
    %1034 = vmatpush.msra.mxu0 %v995
    %1035 = vmatpush.msra.mxu0 %v991
    %1036 = vmatpush.msra.mxu0 %v987
    %1037 = vmatpush.msra.mxu0 %v983
    %1038 = vmatpush.msra.mxu0 %v979
    %1039 = vmatpush.msra.mxu0 %v975
    %1040 = vmatpush.msra.mxu0 %v971
    %1041 = vmatpush.msra.mxu0 %v967
    %1042 = vmatpush.msra.mxu0 %v963
    %1043 = vmatmul.f32.gmra.mxu0 %v962
    %v1044 = vpop.f32.mrf.mxu0
    %v1045 = vadd.f32 0.0, %v1044
    %1046 = vdwg.mxu0
    %1047 = vmatpush.msra.mxu0 %v1024
    %1048 = vmatpush.msra.mxu0 %v1020
    %1049 = vmatpush.msra.mxu0 %v1016
    %1050 = vmatpush.msra.mxu0 %v1012
    %1051 = vmatpush.msra.mxu0 %v1008
    %1052 = vmatpush.msra.mxu0 %v1004
    %1053 = vmatpush.msra.mxu0 %v1000
    %1054 = vmatpush.msra.mxu0 %v996
    %1055 = vmatpush.msra.mxu0 %v992
    %1056 = vmatpush.msra.mxu0 %v988
    %1057 = vmatpush.msra.mxu0 %v984
    %1058 = vmatpush.msra.mxu0 %v980
    %1059 = vmatpush.msra.mxu0 %v976
    %1060 = vmatpush.msra.mxu0 %v972
    %1061 = vmatpush.msra.mxu0 %v968
    %1062 = vmatpush.msra.mxu0 %v964
    %1063 = vmatmul.f32.gmra.mxu0 %v962
    %v1064 = vpop.f32.mrf.mxu0
    %v1065 = vadd.f32 0.0, %v1064
    %1066 = vdwg.mxu0
    %1067 = vmatpush.msra.mxu0 %v1025
    %1068 = vmatpush.msra.mxu0 %v1021
    %1069 = vmatpush.msra.mxu0 %v1017
    %1070 = vmatpush.msra.mxu0 %v1013
    %1071 = vmatpush.msra.mxu0 %v1009
    %1072 = vmatpush.msra.mxu0 %v1005
    %1073 = vmatpush.msra.mxu0 %v1001
    %1074 = vmatpush.msra.mxu0 %v997
    %1075 = vmatpush.msra.mxu0 %v993
    %1076 = vmatpush.msra.mxu0 %v989
    %1077 = vmatpush.msra.mxu0 %v985
    %1078 = vmatpush.msra.mxu0 %v981
    %1079 = vmatpush.msra.mxu0 %v977
    %1080 = vmatpush.msra.mxu0 %v973
    %1081 = vmatpush.msra.mxu0 %v969
    %1082 = vmatpush.msra.mxu0 %v965
    %1083 = vmatmul.f32.gmra.mxu0 %v962
    %v1084 = vpop.f32.mrf.mxu0
    %v1085 = vadd.f32 0.0, %v1084
    %1086 = vdwg.mxu0
    %1087 = vmatpush.msra.mxu0 %v1026
    %1088 = vmatpush.msra.mxu0 %v1022
    %1089 = vmatpush.msra.mxu0 %v1018
    %1090 = vmatpush.msra.mxu0 %v1014
    %1091 = vmatpush.msra.mxu0 %v1010
    %1092 = vmatpush.msra.mxu0 %v1006
    %1093 = vmatpush.msra.mxu0 %v1002
    %1094 = vmatpush.msra.mxu0 %v998
    %1095 = vmatpush.msra.mxu0 %v994
    %1096 = vmatpush.msra.mxu0 %v990
    %1097 = vmatpush.msra.mxu0 %v986
    %1098 = vmatpush.msra.mxu0 %v982
    %1099 = vmatpush.msra.mxu0 %v978
    %1100 = vmatpush.msra.mxu0 %v974
    %1101 = vmatpush.msra.mxu0 %v970
    %1102 = vmatpush.msra.mxu0 %v966
    %1103 = vmatmul.f32.gmra.mxu0 %v962
    %v1104 = vpop.f32.mrf.mxu0
    %v1105 = vadd.f32 0.0, %v1104
    %1106 = vdwg.mxu0
    %v1107 = vadd.f32 %v958, %v1045
    %v1108 = vadd.f32 %v959, %v1065
    %v1109 = vadd.f32 %v960, %v1085
    %v1110 = vadd.f32 %v961, %v1105
    %v1111 = vxor.u32 %v1107, 2147483648
    %v1112 = vmul.f32 %v1111, 1.442695
    %v1113 = vpow.pop %v1112
    %v1114 = vadd.f32 %v1113, 1.0
    %v1115 = vrcp.pop %v1114
    %v1116 = vmul.f32 %v1114, %v1115
    %v1117 = vsub.f32 1.0, %v1116
    %v1118 = vmul.f32 %v1115, %v1117
    %v1119 = vadd.f32 %v1115, %v1118
    %vm1120 = vweird.f32 %v1114
    %vm1121 = vweird.f32 %v1115
    %vm1122 = vmor %vm1120, %vm1121
    %v1123 = vsel %vm1122, %v1115, %v1119
    %v1124 = vand.u32 2147483647, %v1114
    %vm1125 = vcmp.eq.f32.partialorder %v1124, 8.507059e+37
    %v1126 = vand.u32 %v1114, 2147483648
    %v1127 = vor.u32 1.1754944e-38, %v1126
    %v1128 = vsel %vm1125, %v1127, %v1123
    %v1129 = vmul.f32 1.0, %v1128
    %v1130 = vxor.u32 %v1108, 2147483648
    %v1131 = vmul.f32 %v1130, 1.442695
    %v1132 = vpow.pop %v1131
    %v1133 = vadd.f32 %v1132, 1.0
    %v1134 = vrcp.pop %v1133
    %v1135 = vmul.f32 %v1133, %v1134
    %v1136 = vsub.f32 1.0, %v1135
    %v1137 = vmul.f32 %v1134, %v1136
    %v1138 = vadd.f32 %v1134, %v1137
    %vm1139 = vweird.f32 %v1133
    %vm1140 = vweird.f32 %v1134
    %vm1141 = vmor %vm1139, %vm1140
    %v1142 = vsel %vm1141, %v1134, %v1138
    %v1143 = vand.u32 2147483647, %v1133
    %vm1144 = vcmp.eq.f32.partialorder %v1143, 8.507059e+37
    %v1145 = vand.u32 %v1133, 2147483648
    %v1146 = vor.u32 1.1754944e-38, %v1145
    %v1147 = vsel %vm1144, %v1146, %v1142
    %v1148 = vmul.f32 1.0, %v1147
    %v1149 = vtanh.pop %v1109
    %v1150 = vxor.u32 %v1110, 2147483648
    %v1151 = vmul.f32 %v1150, 1.442695
    %v1152 = vpow.pop %v1151
    %v1153 = vadd.f32 %v1152, 1.0
    %v1154 = vrcp.pop %v1153
    %v1155 = vmul.f32 %v1153, %v1154
    %v1156 = vsub.f32 1.0, %v1155
    %v1157 = vmul.f32 %v1154, %v1156
    %v1158 = vadd.f32 %v1154, %v1157
    %vm1159 = vweird.f32 %v1153
    %vm1160 = vweird.f32 %v1154
    %vm1161 = vmor %vm1159, %vm1160
    %v1162 = vsel %vm1161, %v1154, %v1158
    %v1163 = vand.u32 2147483647, %v1153
    %vm1164 = vcmp.eq.f32.partialorder %v1163, 8.507059e+37
    %v1165 = vand.u32 %v1153, 2147483648
    %v1166 = vor.u32 1.1754944e-38, %v1165
    %v1167 = vsel %vm1164, %v1166, %v1162
    %v1168 = vmul.f32 1.0, %v1167
    %v1169 = vld [vmem:[#allocation4] sm:$0xff]
    %v1170 = vmul.f32 %v1148, %v1169
    %v1171 = vmul.f32 %v1129, %v1149
    %v1172 = vadd.f32 %v1170, %v1171
    %v1173 = vtanh.pop %v1172
    %v1174 = vmul.f32 %v1168, %v1173
    %1175 = vst [vmem:[#allocation3] sm:$0xff] %v1174
    %1176 = vst [vmem:[#allocation4] sm:$0xff] %v1172
    %s1177 = scalar_lea.vmem [#allocation2], 32
    %1178 = vst [vmem:[%s1177] sm:$0xff] %v1174
    %s1179 = scalar_lea.vmem [#allocation5], 160
    %v1180 = vld [vmem:[%s1179] sm:$0xff]
    %v1181 = vld [vmem:[%s1179 + $0x8] sm:$0xff]
    %v1182 = vld [vmem:[%s1179 + $0x10] sm:$0xff]
    %v1183 = vld [vmem:[%s1179 + $0x18] sm:$0xff]
    %v1184 = vld [vmem:[#allocation3] sm:$0xff]
    %v1185 = vld [vmem:[#allocation8] sm:$0xff]
    %v1186 = vld [vmem:[#allocation8 + $0x8] sm:$0xff]
    %v1187 = vld [vmem:[#allocation8 + $0x10] sm:$0xff]
    %v1188 = vld [vmem:[#allocation8 + $0x18] sm:$0xff]
    %v1189 = vld [vmem:[#allocation8 + $0x20] sm:$0xff]
    %v1190 = vld [vmem:[#allocation8 + $0x28] sm:$0xff]
    %v1191 = vld [vmem:[#allocation8 + $0x30] sm:$0xff]
    %v1192 = vld [vmem:[#allocation8 + $0x38] sm:$0xff]
    %v1193 = vld [vmem:[#allocation8 + $0x40] sm:$0xff]
    %v1194 = vld [vmem:[#allocation8 + $0x48] sm:$0xff]
    %v1195 = vld [vmem:[#allocation8 + $0x50] sm:$0xff]
    %v1196 = vld [vmem:[#allocation8 + $0x58] sm:$0xff]
    %v1197 = vld [vmem:[#allocation8 + $0x60] sm:$0xff]
    %v1198 = vld [vmem:[#allocation8 + $0x68] sm:$0xff]
    %v1199 = vld [vmem:[#allocation8 + $0x70] sm:$0xff]
    %v1200 = vld [vmem:[#allocation8 + $0x78] sm:$0xff]
    %v1201 = vld [vmem:[#allocation8 + $0x80] sm:$0xff]
    %v1202 = vld [vmem:[#allocation8 + $0x88] sm:$0xff]
    %v1203 = vld [vmem:[#allocation8 + $0x90] sm:$0xff]
    %v1204 = vld [vmem:[#allocation8 + $0x98] sm:$0xff]
    %v1205 = vld [vmem:[#allocation8 + $0xa0] sm:$0xff]
    %v1206 = vld [vmem:[#allocation8 + $0xa8] sm:$0xff]
    %v1207 = vld [vmem:[#allocation8 + $0xb0] sm:$0xff]
    %v1208 = vld [vmem:[#allocation8 + $0xb8] sm:$0xff]
    %v1209 = vld [vmem:[#allocation8 + $0xc0] sm:$0xff]
    %v1210 = vld [vmem:[#allocation8 + $0xc8] sm:$0xff]
    %v1211 = vld [vmem:[#allocation8 + $0xd0] sm:$0xff]
    %v1212 = vld [vmem:[#allocation8 + $0xd8] sm:$0xff]
    %v1213 = vld [vmem:[#allocation8 + $0xe0] sm:$0xff]
    %v1214 = vld [vmem:[#allocation8 + $0xe8] sm:$0xff]
    %v1215 = vld [vmem:[#allocation8 + $0xf0] sm:$0xff]
    %v1216 = vld [vmem:[#allocation8 + $0xf8] sm:$0xff]
    %v1217 = vld [vmem:[#allocation8 + $0x100] sm:$0xff]
    %v1218 = vld [vmem:[#allocation8 + $0x108] sm:$0xff]
    %v1219 = vld [vmem:[#allocation8 + $0x110] sm:$0xff]
    %v1220 = vld [vmem:[#allocation8 + $0x118] sm:$0xff]
    %v1221 = vld [vmem:[#allocation8 + $0x120] sm:$0xff]
    %v1222 = vld [vmem:[#allocation8 + $0x128] sm:$0xff]
    %v1223 = vld [vmem:[#allocation8 + $0x130] sm:$0xff]
    %v1224 = vld [vmem:[#allocation8 + $0x138] sm:$0xff]
    %v1225 = vld [vmem:[#allocation8 + $0x140] sm:$0xff]
    %v1226 = vld [vmem:[#allocation8 + $0x148] sm:$0xff]
    %v1227 = vld [vmem:[#allocation8 + $0x150] sm:$0xff]
    %v1228 = vld [vmem:[#allocation8 + $0x158] sm:$0xff]
    %v1229 = vld [vmem:[#allocation8 + $0x160] sm:$0xff]
    %v1230 = vld [vmem:[#allocation8 + $0x168] sm:$0xff]
    %v1231 = vld [vmem:[#allocation8 + $0x170] sm:$0xff]
    %v1232 = vld [vmem:[#allocation8 + $0x178] sm:$0xff]
    %v1233 = vld [vmem:[#allocation8 + $0x180] sm:$0xff]
    %v1234 = vld [vmem:[#allocation8 + $0x188] sm:$0xff]
    %v1235 = vld [vmem:[#allocation8 + $0x190] sm:$0xff]
    %v1236 = vld [vmem:[#allocation8 + $0x198] sm:$0xff]
    %v1237 = vld [vmem:[#allocation8 + $0x1a0] sm:$0xff]
    %v1238 = vld [vmem:[#allocation8 + $0x1a8] sm:$0xff]
    %v1239 = vld [vmem:[#allocation8 + $0x1b0] sm:$0xff]
    %v1240 = vld [vmem:[#allocation8 + $0x1b8] sm:$0xff]
    %v1241 = vld [vmem:[#allocation8 + $0x1c0] sm:$0xff]
    %v1242 = vld [vmem:[#allocation8 + $0x1c8] sm:$0xff]
    %v1243 = vld [vmem:[#allocation8 + $0x1d0] sm:$0xff]
    %v1244 = vld [vmem:[#allocation8 + $0x1d8] sm:$0xff]
    %v1245 = vld [vmem:[#allocation8 + $0x1e0] sm:$0xff]
    %v1246 = vld [vmem:[#allocation8 + $0x1e8] sm:$0xff]
    %v1247 = vld [vmem:[#allocation8 + $0x1f0] sm:$0xff]
    %v1248 = vld [vmem:[#allocation8 + $0x1f8] sm:$0xff]
    %1249 = vmatpush.msra.mxu0 %v1245
    %1250 = vmatpush.msra.mxu0 %v1241
    %1251 = vmatpush.msra.mxu0 %v1237
    %1252 = vmatpush.msra.mxu0 %v1233
    %1253 = vmatpush.msra.mxu0 %v1229
    %1254 = vmatpush.msra.mxu0 %v1225
    %1255 = vmatpush.msra.mxu0 %v1221
    %1256 = vmatpush.msra.mxu0 %v1217
    %1257 = vmatpush.msra.mxu0 %v1213
    %1258 = vmatpush.msra.mxu0 %v1209
    %1259 = vmatpush.msra.mxu0 %v1205
    %1260 = vmatpush.msra.mxu0 %v1201
    %1261 = vmatpush.msra.mxu0 %v1197
    %1262 = vmatpush.msra.mxu0 %v1193
    %1263 = vmatpush.msra.mxu0 %v1189
    %1264 = vmatpush.msra.mxu0 %v1185
    %1265 = vmatmul.f32.gmra.mxu0 %v1184
    %v1266 = vpop.f32.mrf.mxu0
    %v1267 = vadd.f32 0.0, %v1266
    %1268 = vdwg.mxu0
    %1269 = vmatpush.msra.mxu0 %v1246
    %1270 = vmatpush.msra.mxu0 %v1242
    %1271 = vmatpush.msra.mxu0 %v1238
    %1272 = vmatpush.msra.mxu0 %v1234
    %1273 = vmatpush.msra.mxu0 %v1230
    %1274 = vmatpush.msra.mxu0 %v1226
    %1275 = vmatpush.msra.mxu0 %v1222
    %1276 = vmatpush.msra.mxu0 %v1218
    %1277 = vmatpush.msra.mxu0 %v1214
    %1278 = vmatpush.msra.mxu0 %v1210
    %1279 = vmatpush.msra.mxu0 %v1206
    %1280 = vmatpush.msra.mxu0 %v1202
    %1281 = vmatpush.msra.mxu0 %v1198
    %1282 = vmatpush.msra.mxu0 %v1194
    %1283 = vmatpush.msra.mxu0 %v1190
    %1284 = vmatpush.msra.mxu0 %v1186
    %1285 = vmatmul.f32.gmra.mxu0 %v1184
    %v1286 = vpop.f32.mrf.mxu0
    %v1287 = vadd.f32 0.0, %v1286
    %1288 = vdwg.mxu0
    %1289 = vmatpush.msra.mxu0 %v1247
    %1290 = vmatpush.msra.mxu0 %v1243
    %1291 = vmatpush.msra.mxu0 %v1239
    %1292 = vmatpush.msra.mxu0 %v1235
    %1293 = vmatpush.msra.mxu0 %v1231
    %1294 = vmatpush.msra.mxu0 %v1227
    %1295 = vmatpush.msra.mxu0 %v1223
    %1296 = vmatpush.msra.mxu0 %v1219
    %1297 = vmatpush.msra.mxu0 %v1215
    %1298 = vmatpush.msra.mxu0 %v1211
    %1299 = vmatpush.msra.mxu0 %v1207
    %1300 = vmatpush.msra.mxu0 %v1203
    %1301 = vmatpush.msra.mxu0 %v1199
    %1302 = vmatpush.msra.mxu0 %v1195
    %1303 = vmatpush.msra.mxu0 %v1191
    %1304 = vmatpush.msra.mxu0 %v1187
    %1305 = vmatmul.f32.gmra.mxu0 %v1184
    %v1306 = vpop.f32.mrf.mxu0
    %v1307 = vadd.f32 0.0, %v1306
    %1308 = vdwg.mxu0
    %1309 = vmatpush.msra.mxu0 %v1248
    %1310 = vmatpush.msra.mxu0 %v1244
    %1311 = vmatpush.msra.mxu0 %v1240
    %1312 = vmatpush.msra.mxu0 %v1236
    %1313 = vmatpush.msra.mxu0 %v1232
    %1314 = vmatpush.msra.mxu0 %v1228
    %1315 = vmatpush.msra.mxu0 %v1224
    %1316 = vmatpush.msra.mxu0 %v1220
    %1317 = vmatpush.msra.mxu0 %v1216
    %1318 = vmatpush.msra.mxu0 %v1212
    %1319 = vmatpush.msra.mxu0 %v1208
    %1320 = vmatpush.msra.mxu0 %v1204
    %1321 = vmatpush.msra.mxu0 %v1200
    %1322 = vmatpush.msra.mxu0 %v1196
    %1323 = vmatpush.msra.mxu0 %v1192
    %1324 = vmatpush.msra.mxu0 %v1188
    %1325 = vmatmul.f32.gmra.mxu0 %v1184
    %v1326 = vpop.f32.mrf.mxu0
    %v1327 = vadd.f32 0.0, %v1326
    %1328 = vdwg.mxu0
    %v1329 = vadd.f32 %v1180, %v1267
    %v1330 = vadd.f32 %v1181, %v1287
    %v1331 = vadd.f32 %v1182, %v1307
    %v1332 = vadd.f32 %v1183, %v1327
    %v1333 = vxor.u32 %v1329, 2147483648
    %v1334 = vmul.f32 %v1333, 1.442695
    %v1335 = vpow.pop %v1334
    %v1336 = vadd.f32 %v1335, 1.0
    %v1337 = vrcp.pop %v1336
    %v1338 = vmul.f32 %v1336, %v1337
    %v1339 = vsub.f32 1.0, %v1338
    %v1340 = vmul.f32 %v1337, %v1339
    %v1341 = vadd.f32 %v1337, %v1340
    %vm1342 = vweird.f32 %v1336
    %vm1343 = vweird.f32 %v1337
    %vm1344 = vmor %vm1342, %vm1343
    %v1345 = vsel %vm1344, %v1337, %v1341
    %v1346 = vand.u32 2147483647, %v1336
    %vm1347 = vcmp.eq.f32.partialorder %v1346, 8.507059e+37
    %v1348 = vand.u32 %v1336, 2147483648
    %v1349 = vor.u32 1.1754944e-38, %v1348
    %v1350 = vsel %vm1347, %v1349, %v1345
    %v1351 = vmul.f32 1.0, %v1350
    %v1352 = vxor.u32 %v1330, 2147483648
    %v1353 = vmul.f32 %v1352, 1.442695
    %v1354 = vpow.pop %v1353
    %v1355 = vadd.f32 %v1354, 1.0
    %v1356 = vrcp.pop %v1355
    %v1357 = vmul.f32 %v1355, %v1356
    %v1358 = vsub.f32 1.0, %v1357
    %v1359 = vmul.f32 %v1356, %v1358
    %v1360 = vadd.f32 %v1356, %v1359
    %vm1361 = vweird.f32 %v1355
    %vm1362 = vweird.f32 %v1356
    %vm1363 = vmor %vm1361, %vm1362
    %v1364 = vsel %vm1363, %v1356, %v1360
    %v1365 = vand.u32 2147483647, %v1355
    %vm1366 = vcmp.eq.f32.partialorder %v1365, 8.507059e+37
    %v1367 = vand.u32 %v1355, 2147483648
    %v1368 = vor.u32 1.1754944e-38, %v1367
    %v1369 = vsel %vm1366, %v1368, %v1364
    %v1370 = vmul.f32 1.0, %v1369
    %v1371 = vtanh.pop %v1331
    %v1372 = vxor.u32 %v1332, 2147483648
    %v1373 = vmul.f32 %v1372, 1.442695
    %v1374 = vpow.pop %v1373
    %v1375 = vadd.f32 %v1374, 1.0
    %v1376 = vrcp.pop %v1375
    %v1377 = vmul.f32 %v1375, %v1376
    %v1378 = vsub.f32 1.0, %v1377
    %v1379 = vmul.f32 %v1376, %v1378
    %v1380 = vadd.f32 %v1376, %v1379
    %vm1381 = vweird.f32 %v1375
    %vm1382 = vweird.f32 %v1376
    %vm1383 = vmor %vm1381, %vm1382
    %v1384 = vsel %vm1383, %v1376, %v1380
    %v1385 = vand.u32 2147483647, %v1375
    %vm1386 = vcmp.eq.f32.partialorder %v1385, 8.507059e+37
    %v1387 = vand.u32 %v1375, 2147483648
    %v1388 = vor.u32 1.1754944e-38, %v1387
    %v1389 = vsel %vm1386, %v1388, %v1384
    %v1390 = vmul.f32 1.0, %v1389
    %v1391 = vld [vmem:[#allocation4] sm:$0xff]
    %v1392 = vmul.f32 %v1370, %v1391
    %v1393 = vmul.f32 %v1351, %v1371
    %v1394 = vadd.f32 %v1392, %v1393
    %v1395 = vtanh.pop %v1394
    %v1396 = vmul.f32 %v1390, %v1395
    %1397 = vst [vmem:[#allocation3] sm:$0xff] %v1396
    %1398 = vst [vmem:[#allocation4] sm:$0xff] %v1394
    %s1399 = scalar_lea.vmem [#allocation2], 40
    %1400 = vst [vmem:[%s1399] sm:$0xff] %v1396
    %s1401 = scalar_lea.vmem [#allocation5], 192
    %v1402 = vld [vmem:[%s1401] sm:$0xff]
    %v1403 = vld [vmem:[%s1401 + $0x8] sm:$0xff]
    %v1404 = vld [vmem:[%s1401 + $0x10] sm:$0xff]
    %v1405 = vld [vmem:[%s1401 + $0x18] sm:$0xff]
    %v1406 = vld [vmem:[#allocation3] sm:$0xff]
    %v1407 = vld [vmem:[#allocation8] sm:$0xff]
    %v1408 = vld [vmem:[#allocation8 + $0x8] sm:$0xff]
    %v1409 = vld [vmem:[#allocation8 + $0x10] sm:$0xff]
    %v1410 = vld [vmem:[#allocation8 + $0x18] sm:$0xff]
    %v1411 = vld [vmem:[#allocation8 + $0x20] sm:$0xff]
    %v1412 = vld [vmem:[#allocation8 + $0x28] sm:$0xff]
    %v1413 = vld [vmem:[#allocation8 + $0x30] sm:$0xff]
    %v1414 = vld [vmem:[#allocation8 + $0x38] sm:$0xff]
    %v1415 = vld [vmem:[#allocation8 + $0x40] sm:$0xff]
    %v1416 = vld [vmem:[#allocation8 + $0x48] sm:$0xff]
    %v1417 = vld [vmem:[#allocation8 + $0x50] sm:$0xff]
    %v1418 = vld [vmem:[#allocation8 + $0x58] sm:$0xff]
    %v1419 = vld [vmem:[#allocation8 + $0x60] sm:$0xff]
    %v1420 = vld [vmem:[#allocation8 + $0x68] sm:$0xff]
    %v1421 = vld [vmem:[#allocation8 + $0x70] sm:$0xff]
    %v1422 = vld [vmem:[#allocation8 + $0x78] sm:$0xff]
    %v1423 = vld [vmem:[#allocation8 + $0x80] sm:$0xff]
    %v1424 = vld [vmem:[#allocation8 + $0x88] sm:$0xff]
    %v1425 = vld [vmem:[#allocation8 + $0x90] sm:$0xff]
    %v1426 = vld [vmem:[#allocation8 + $0x98] sm:$0xff]
    %v1427 = vld [vmem:[#allocation8 + $0xa0] sm:$0xff]
    %v1428 = vld [vmem:[#allocation8 + $0xa8] sm:$0xff]
    %v1429 = vld [vmem:[#allocation8 + $0xb0] sm:$0xff]
    %v1430 = vld [vmem:[#allocation8 + $0xb8] sm:$0xff]
    %v1431 = vld [vmem:[#allocation8 + $0xc0] sm:$0xff]
    %v1432 = vld [vmem:[#allocation8 + $0xc8] sm:$0xff]
    %v1433 = vld [vmem:[#allocation8 + $0xd0] sm:$0xff]
    %v1434 = vld [vmem:[#allocation8 + $0xd8] sm:$0xff]
    %v1435 = vld [vmem:[#allocation8 + $0xe0] sm:$0xff]
    %v1436 = vld [vmem:[#allocation8 + $0xe8] sm:$0xff]
    %v1437 = vld [vmem:[#allocation8 + $0xf0] sm:$0xff]
    %v1438 = vld [vmem:[#allocation8 + $0xf8] sm:$0xff]
    %v1439 = vld [vmem:[#allocation8 + $0x100] sm:$0xff]
    %v1440 = vld [vmem:[#allocation8 + $0x108] sm:$0xff]
    %v1441 = vld [vmem:[#allocation8 + $0x110] sm:$0xff]
    %v1442 = vld [vmem:[#allocation8 + $0x118] sm:$0xff]
    %v1443 = vld [vmem:[#allocation8 + $0x120] sm:$0xff]
    %v1444 = vld [vmem:[#allocation8 + $0x128] sm:$0xff]
    %v1445 = vld [vmem:[#allocation8 + $0x130] sm:$0xff]
    %v1446 = vld [vmem:[#allocation8 + $0x138] sm:$0xff]
    %v1447 = vld [vmem:[#allocation8 + $0x140] sm:$0xff]
    %v1448 = vld [vmem:[#allocation8 + $0x148] sm:$0xff]
    %v1449 = vld [vmem:[#allocation8 + $0x150] sm:$0xff]
    %v1450 = vld [vmem:[#allocation8 + $0x158] sm:$0xff]
    %v1451 = vld [vmem:[#allocation8 + $0x160] sm:$0xff]
    %v1452 = vld [vmem:[#allocation8 + $0x168] sm:$0xff]
    %v1453 = vld [vmem:[#allocation8 + $0x170] sm:$0xff]
    %v1454 = vld [vmem:[#allocation8 + $0x178] sm:$0xff]
    %v1455 = vld [vmem:[#allocation8 + $0x180] sm:$0xff]
    %v1456 = vld [vmem:[#allocation8 + $0x188] sm:$0xff]
    %v1457 = vld [vmem:[#allocation8 + $0x190] sm:$0xff]
    %v1458 = vld [vmem:[#allocation8 + $0x198] sm:$0xff]
    %v1459 = vld [vmem:[#allocation8 + $0x1a0] sm:$0xff]
    %v1460 = vld [vmem:[#allocation8 + $0x1a8] sm:$0xff]
    %v1461 = vld [vmem:[#allocation8 + $0x1b0] sm:$0xff]
    %v1462 = vld [vmem:[#allocation8 + $0x1b8] sm:$0xff]
    %v1463 = vld [vmem:[#allocation8 + $0x1c0] sm:$0xff]
    %v1464 = vld [vmem:[#allocation8 + $0x1c8] sm:$0xff]
    %v1465 = vld [vmem:[#allocation8 + $0x1d0] sm:$0xff]
    %v1466 = vld [vmem:[#allocation8 + $0x1d8] sm:$0xff]
    %v1467 = vld [vmem:[#allocation8 + $0x1e0] sm:$0xff]
    %v1468 = vld [vmem:[#allocation8 + $0x1e8] sm:$0xff]
    %v1469 = vld [vmem:[#allocation8 + $0x1f0] sm:$0xff]
    %v1470 = vld [vmem:[#allocation8 + $0x1f8] sm:$0xff]
    %1471 = vmatpush.msra.mxu0 %v1467
    %1472 = vmatpush.msra.mxu0 %v1463
    %1473 = vmatpush.msra.mxu0 %v1459
    %1474 = vmatpush.msra.mxu0 %v1455
    %1475 = vmatpush.msra.mxu0 %v1451
    %1476 = vmatpush.msra.mxu0 %v1447
    %1477 = vmatpush.msra.mxu0 %v1443
    %1478 = vmatpush.msra.mxu0 %v1439
    %1479 = vmatpush.msra.mxu0 %v1435
    %1480 = vmatpush.msra.mxu0 %v1431
    %1481 = vmatpush.msra.mxu0 %v1427
    %1482 = vmatpush.msra.mxu0 %v1423
    %1483 = vmatpush.msra.mxu0 %v1419
    %1484 = vmatpush.msra.mxu0 %v1415
    %1485 = vmatpush.msra.mxu0 %v1411
    %1486 = vmatpush.msra.mxu0 %v1407
    %1487 = vmatmul.f32.gmra.mxu0 %v1406
    %v1488 = vpop.f32.mrf.mxu0
    %v1489 = vadd.f32 0.0, %v1488
    %1490 = vdwg.mxu0
    %1491 = vmatpush.msra.mxu0 %v1468
    %1492 = vmatpush.msra.mxu0 %v1464
    %1493 = vmatpush.msra.mxu0 %v1460
    %1494 = vmatpush.msra.mxu0 %v1456
    %1495 = vmatpush.msra.mxu0 %v1452
    %1496 = vmatpush.msra.mxu0 %v1448
    %1497 = vmatpush.msra.mxu0 %v1444
    %1498 = vmatpush.msra.mxu0 %v1440
    %1499 = vmatpush.msra.mxu0 %v1436
    %1500 = vmatpush.msra.mxu0 %v1432
    %1501 = vmatpush.msra.mxu0 %v1428
    %1502 = vmatpush.msra.mxu0 %v1424
    %1503 = vmatpush.msra.mxu0 %v1420
    %1504 = vmatpush.msra.mxu0 %v1416
    %1505 = vmatpush.msra.mxu0 %v1412
    %1506 = vmatpush.msra.mxu0 %v1408
    %1507 = vmatmul.f32.gmra.mxu0 %v1406
    %v1508 = vpop.f32.mrf.mxu0
    %v1509 = vadd.f32 0.0, %v1508
    %1510 = vdwg.mxu0
    %1511 = vmatpush.msra.mxu0 %v1469
    %1512 = vmatpush.msra.mxu0 %v1465
    %1513 = vmatpush.msra.mxu0 %v1461
    %1514 = vmatpush.msra.mxu0 %v1457
    %1515 = vmatpush.msra.mxu0 %v1453
    %1516 = vmatpush.msra.mxu0 %v1449
    %1517 = vmatpush.msra.mxu0 %v1445
    %1518 = vmatpush.msra.mxu0 %v1441
    %1519 = vmatpush.msra.mxu0 %v1437
    %1520 = vmatpush.msra.mxu0 %v1433
    %1521 = vmatpush.msra.mxu0 %v1429
    %1522 = vmatpush.msra.mxu0 %v1425
    %1523 = vmatpush.msra.mxu0 %v1421
    %1524 = vmatpush.msra.mxu0 %v1417
    %1525 = vmatpush.msra.mxu0 %v1413
    %1526 = vmatpush.msra.mxu0 %v1409
    %1527 = vmatmul.f32.gmra.mxu0 %v1406
    %v1528 = vpop.f32.mrf.mxu0
    %v1529 = vadd.f32 0.0, %v1528
    %1530 = vdwg.mxu0
    %1531 = vmatpush.msra.mxu0 %v1470
    %1532 = vmatpush.msra.mxu0 %v1466
    %1533 = vmatpush.msra.mxu0 %v1462
    %1534 = vmatpush.msra.mxu0 %v1458
    %1535 = vmatpush.msra.mxu0 %v1454
    %1536 = vmatpush.msra.mxu0 %v1450
    %1537 = vmatpush.msra.mxu0 %v1446
    %1538 = vmatpush.msra.mxu0 %v1442
    %1539 = vmatpush.msra.mxu0 %v1438
    %1540 = vmatpush.msra.mxu0 %v1434
    %1541 = vmatpush.msra.mxu0 %v1430
    %1542 = vmatpush.msra.mxu0 %v1426
    %1543 = vmatpush.msra.mxu0 %v1422
    %1544 = vmatpush.msra.mxu0 %v1418
    %1545 = vmatpush.msra.mxu0 %v1414
    %1546 = vmatpush.msra.mxu0 %v1410
    %1547 = vmatmul.f32.gmra.mxu0 %v1406
    %v1548 = vpop.f32.mrf.mxu0
    %v1549 = vadd.f32 0.0, %v1548
    %1550 = vdwg.mxu0
    %v1551 = vadd.f32 %v1402, %v1489
    %v1552 = vadd.f32 %v1403, %v1509
    %v1553 = vadd.f32 %v1404, %v1529
    %v1554 = vadd.f32 %v1405, %v1549
    %v1555 = vxor.u32 %v1551, 2147483648
    %v1556 = vmul.f32 %v1555, 1.442695
    %v1557 = vpow.pop %v1556
    %v1558 = vadd.f32 %v1557, 1.0
    %v1559 = vrcp.pop %v1558
    %v1560 = vmul.f32 %v1558, %v1559
    %v1561 = vsub.f32 1.0, %v1560
    %v1562 = vmul.f32 %v1559, %v1561
    %v1563 = vadd.f32 %v1559, %v1562
    %vm1564 = vweird.f32 %v1558
    %vm1565 = vweird.f32 %v1559
    %vm1566 = vmor %vm1564, %vm1565
    %v1567 = vsel %vm1566, %v1559, %v1563
    %v1568 = vand.u32 2147483647, %v1558
    %vm1569 = vcmp.eq.f32.partialorder %v1568, 8.507059e+37
    %v1570 = vand.u32 %v1558, 2147483648
    %v1571 = vor.u32 1.1754944e-38, %v1570
    %v1572 = vsel %vm1569, %v1571, %v1567
    %v1573 = vmul.f32 1.0, %v1572
    %v1574 = vxor.u32 %v1552, 2147483648
    %v1575 = vmul.f32 %v1574, 1.442695
    %v1576 = vpow.pop %v1575
    %v1577 = vadd.f32 %v1576, 1.0
    %v1578 = vrcp.pop %v1577
    %v1579 = vmul.f32 %v1577, %v1578
    %v1580 = vsub.f32 1.0, %v1579
    %v1581 = vmul.f32 %v1578, %v1580
    %v1582 = vadd.f32 %v1578, %v1581
    %vm1583 = vweird.f32 %v1577
    %vm1584 = vweird.f32 %v1578
    %vm1585 = vmor %vm1583, %vm1584
    %v1586 = vsel %vm1585, %v1578, %v1582
    %v1587 = vand.u32 2147483647, %v1577
    %vm1588 = vcmp.eq.f32.partialorder %v1587, 8.507059e+37
    %v1589 = vand.u32 %v1577, 2147483648
    %v1590 = vor.u32 1.1754944e-38, %v1589
    %v1591 = vsel %vm1588, %v1590, %v1586
    %v1592 = vmul.f32 1.0, %v1591
    %v1593 = vtanh.pop %v1553
    %v1594 = vxor.u32 %v1554, 2147483648
    %v1595 = vmul.f32 %v1594, 1.442695
    %v1596 = vpow.pop %v1595
    %v1597 = vadd.f32 %v1596, 1.0
    %v1598 = vrcp.pop %v1597
    %v1599 = vmul.f32 %v1597, %v1598
    %v1600 = vsub.f32 1.0, %v1599
    %v1601 = vmul.f32 %v1598, %v1600
    %v1602 = vadd.f32 %v1598, %v1601
    %vm1603 = vweird.f32 %v1597
    %vm1604 = vweird.f32 %v1598
    %vm1605 = vmor %vm1603, %vm1604
    %v1606 = vsel %vm1605, %v1598, %v1602
    %v1607 = vand.u32 2147483647, %v1597
    %vm1608 = vcmp.eq.f32.partialorder %v1607, 8.507059e+37
    %v1609 = vand.u32 %v1597, 2147483648
    %v1610 = vor.u32 1.1754944e-38, %v1609
    %v1611 = vsel %vm1608, %v1610, %v1606
    %v1612 = vmul.f32 1.0, %v1611
    %v1613 = vld [vmem:[#allocation4] sm:$0xff]
    %v1614 = vmul.f32 %v1592, %v1613
    %v1615 = vmul.f32 %v1573, %v1593
    %v1616 = vadd.f32 %v1614, %v1615
    %v1617 = vtanh.pop %v1616
    %v1618 = vmul.f32 %v1612, %v1617
    %1619 = vst [vmem:[#allocation3] sm:$0xff] %v1618
    %1620 = vst [vmem:[#allocation4] sm:$0xff] %v1616
    %s1621 = scalar_lea.vmem [#allocation2], 48
    %1622 = vst [vmem:[%s1621] sm:$0xff] %v1618
    %s1623 = scalar_lea.vmem [#allocation5], 224
    %v1624 = vld [vmem:[%s1623] sm:$0xff]
    %v1625 = vld [vmem:[%s1623 + $0x8] sm:$0xff]
    %v1626 = vld [vmem:[%s1623 + $0x10] sm:$0xff]
    %v1627 = vld [vmem:[%s1623 + $0x18] sm:$0xff]
    %v1628 = vld [vmem:[#allocation3] sm:$0xff]
    %v1629 = vld [vmem:[#allocation8] sm:$0xff]
    %v1630 = vld [vmem:[#allocation8 + $0x8] sm:$0xff]
    %v1631 = vld [vmem:[#allocation8 + $0x10] sm:$0xff]
    %v1632 = vld [vmem:[#allocation8 + $0x18] sm:$0xff]
    %v1633 = vld [vmem:[#allocation8 + $0x20] sm:$0xff]
    %v1634 = vld [vmem:[#allocation8 + $0x28] sm:$0xff]
    %v1635 = vld [vmem:[#allocation8 + $0x30] sm:$0xff]
    %v1636 = vld [vmem:[#allocation8 + $0x38] sm:$0xff]
    %v1637 = vld [vmem:[#allocation8 + $0x40] sm:$0xff]
    %v1638 = vld [vmem:[#allocation8 + $0x48] sm:$0xff]
    %v1639 = vld [vmem:[#allocation8 + $0x50] sm:$0xff]
    %v1640 = vld [vmem:[#allocation8 + $0x58] sm:$0xff]
    %v1641 = vld [vmem:[#allocation8 + $0x60] sm:$0xff]
    %v1642 = vld [vmem:[#allocation8 + $0x68] sm:$0xff]
    %v1643 = vld [vmem:[#allocation8 + $0x70] sm:$0xff]
    %v1644 = vld [vmem:[#allocation8 + $0x78] sm:$0xff]
    %v1645 = vld [vmem:[#allocation8 + $0x80] sm:$0xff]
    %v1646 = vld [vmem:[#allocation8 + $0x88] sm:$0xff]
    %v1647 = vld [vmem:[#allocation8 + $0x90] sm:$0xff]
    %v1648 = vld [vmem:[#allocation8 + $0x98] sm:$0xff]
    %v1649 = vld [vmem:[#allocation8 + $0xa0] sm:$0xff]
    %v1650 = vld [vmem:[#allocation8 + $0xa8] sm:$0xff]
    %v1651 = vld [vmem:[#allocation8 + $0xb0] sm:$0xff]
    %v1652 = vld [vmem:[#allocation8 + $0xb8] sm:$0xff]
    %v1653 = vld [vmem:[#allocation8 + $0xc0] sm:$0xff]
    %v1654 = vld [vmem:[#allocation8 + $0xc8] sm:$0xff]
    %v1655 = vld [vmem:[#allocation8 + $0xd0] sm:$0xff]
    %v1656 = vld [vmem:[#allocation8 + $0xd8] sm:$0xff]
    %v1657 = vld [vmem:[#allocation8 + $0xe0] sm:$0xff]
    %v1658 = vld [vmem:[#allocation8 + $0xe8] sm:$0xff]
    %v1659 = vld [vmem:[#allocation8 + $0xf0] sm:$0xff]
    %v1660 = vld [vmem:[#allocation8 + $0xf8] sm:$0xff]
    %v1661 = vld [vmem:[#allocation8 + $0x100] sm:$0xff]
    %v1662 = vld [vmem:[#allocation8 + $0x108] sm:$0xff]
    %v1663 = vld [vmem:[#allocation8 + $0x110] sm:$0xff]
    %v1664 = vld [vmem:[#allocation8 + $0x118] sm:$0xff]
    %v1665 = vld [vmem:[#allocation8 + $0x120] sm:$0xff]
    %v1666 = vld [vmem:[#allocation8 + $0x128] sm:$0xff]
    %v1667 = vld [vmem:[#allocation8 + $0x130] sm:$0xff]
    %v1668 = vld [vmem:[#allocation8 + $0x138] sm:$0xff]
    %v1669 = vld [vmem:[#allocation8 + $0x140] sm:$0xff]
    %v1670 = vld [vmem:[#allocation8 + $0x148] sm:$0xff]
    %v1671 = vld [vmem:[#allocation8 + $0x150] sm:$0xff]
    %v1672 = vld [vmem:[#allocation8 + $0x158] sm:$0xff]
    %v1673 = vld [vmem:[#allocation8 + $0x160] sm:$0xff]
    %v1674 = vld [vmem:[#allocation8 + $0x168] sm:$0xff]
    %v1675 = vld [vmem:[#allocation8 + $0x170] sm:$0xff]
    %v1676 = vld [vmem:[#allocation8 + $0x178] sm:$0xff]
    %v1677 = vld [vmem:[#allocation8 + $0x180] sm:$0xff]
    %v1678 = vld [vmem:[#allocation8 + $0x188] sm:$0xff]
    %v1679 = vld [vmem:[#allocation8 + $0x190] sm:$0xff]
    %v1680 = vld [vmem:[#allocation8 + $0x198] sm:$0xff]
    %v1681 = vld [vmem:[#allocation8 + $0x1a0] sm:$0xff]
    %v1682 = vld [vmem:[#allocation8 + $0x1a8] sm:$0xff]
    %v1683 = vld [vmem:[#allocation8 + $0x1b0] sm:$0xff]
    %v1684 = vld [vmem:[#allocation8 + $0x1b8] sm:$0xff]
    %v1685 = vld [vmem:[#allocation8 + $0x1c0] sm:$0xff]
    %v1686 = vld [vmem:[#allocation8 + $0x1c8] sm:$0xff]
    %v1687 = vld [vmem:[#allocation8 + $0x1d0] sm:$0xff]
    %v1688 = vld [vmem:[#allocation8 + $0x1d8] sm:$0xff]
    %v1689 = vld [vmem:[#allocation8 + $0x1e0] sm:$0xff]
    %v1690 = vld [vmem:[#allocation8 + $0x1e8] sm:$0xff]
    %v1691 = vld [vmem:[#allocation8 + $0x1f0] sm:$0xff]
    %v1692 = vld [vmem:[#allocation8 + $0x1f8] sm:$0xff]
    %1693 = vmatpush.msra.mxu0 %v1689
    %1694 = vmatpush.msra.mxu0 %v1685
    %1695 = vmatpush.msra.mxu0 %v1681
    %1696 = vmatpush.msra.mxu0 %v1677
    %1697 = vmatpush.msra.mxu0 %v1673
    %1698 = vmatpush.msra.mxu0 %v1669
    %1699 = vmatpush.msra.mxu0 %v1665
    %1700 = vmatpush.msra.mxu0 %v1661
    %1701 = vmatpush.msra.mxu0 %v1657
    %1702 = vmatpush.msra.mxu0 %v1653
    %1703 = vmatpush.msra.mxu0 %v1649
    %1704 = vmatpush.msra.mxu0 %v1645
    %1705 = vmatpush.msra.mxu0 %v1641
    %1706 = vmatpush.msra.mxu0 %v1637
    %1707 = vmatpush.msra.mxu0 %v1633
    %1708 = vmatpush.msra.mxu0 %v1629
    %1709 = vmatmul.f32.gmra.mxu0 %v1628
    %v1710 = vpop.f32.mrf.mxu0
    %v1711 = vadd.f32 0.0, %v1710
    %1712 = vdwg.mxu0
    %1713 = vmatpush.msra.mxu0 %v1690
    %1714 = vmatpush.msra.mxu0 %v1686
    %1715 = vmatpush.msra.mxu0 %v1682
    %1716 = vmatpush.msra.mxu0 %v1678
    %1717 = vmatpush.msra.mxu0 %v1674
    %1718 = vmatpush.msra.mxu0 %v1670
    %1719 = vmatpush.msra.mxu0 %v1666
    %1720 = vmatpush.msra.mxu0 %v1662
    %1721 = vmatpush.msra.mxu0 %v1658
    %1722 = vmatpush.msra.mxu0 %v1654
    %1723 = vmatpush.msra.mxu0 %v1650
    %1724 = vmatpush.msra.mxu0 %v1646
    %1725 = vmatpush.msra.mxu0 %v1642
    %1726 = vmatpush.msra.mxu0 %v1638
    %1727 = vmatpush.msra.mxu0 %v1634
    %1728 = vmatpush.msra.mxu0 %v1630
    %1729 = vmatmul.f32.gmra.mxu0 %v1628
    %v1730 = vpop.f32.mrf.mxu0
    %v1731 = vadd.f32 0.0, %v1730
    %1732 = vdwg.mxu0
    %1733 = vmatpush.msra.mxu0 %v1691
    %1734 = vmatpush.msra.mxu0 %v1687
    %1735 = vmatpush.msra.mxu0 %v1683
    %1736 = vmatpush.msra.mxu0 %v1679
    %1737 = vmatpush.msra.mxu0 %v1675
    %1738 = vmatpush.msra.mxu0 %v1671
    %1739 = vmatpush.msra.mxu0 %v1667
    %1740 = vmatpush.msra.mxu0 %v1663
    %1741 = vmatpush.msra.mxu0 %v1659
    %1742 = vmatpush.msra.mxu0 %v1655
    %1743 = vmatpush.msra.mxu0 %v1651
    %1744 = vmatpush.msra.mxu0 %v1647
    %1745 = vmatpush.msra.mxu0 %v1643
    %1746 = vmatpush.msra.mxu0 %v1639
    %1747 = vmatpush.msra.mxu0 %v1635
    %1748 = vmatpush.msra.mxu0 %v1631
    %1749 = vmatmul.f32.gmra.mxu0 %v1628
    %v1750 = vpop.f32.mrf.mxu0
    %v1751 = vadd.f32 0.0, %v1750
    %1752 = vdwg.mxu0
    %1753 = vmatpush.msra.mxu0 %v1692
    %1754 = vmatpush.msra.mxu0 %v1688
    %1755 = vmatpush.msra.mxu0 %v1684
    %1756 = vmatpush.msra.mxu0 %v1680
    %1757 = vmatpush.msra.mxu0 %v1676
    %1758 = vmatpush.msra.mxu0 %v1672
    %1759 = vmatpush.msra.mxu0 %v1668
    %1760 = vmatpush.msra.mxu0 %v1664
    %1761 = vmatpush.msra.mxu0 %v1660
    %1762 = vmatpush.msra.mxu0 %v1656
    %1763 = vmatpush.msra.mxu0 %v1652
    %1764 = vmatpush.msra.mxu0 %v1648
    %1765 = vmatpush.msra.mxu0 %v1644
    %1766 = vmatpush.msra.mxu0 %v1640
    %1767 = vmatpush.msra.mxu0 %v1636
    %1768 = vmatpush.msra.mxu0 %v1632
    %1769 = vmatmul.f32.gmra.mxu0 %v1628
    %v1770 = vpop.f32.mrf.mxu0
    %v1771 = vadd.f32 0.0, %v1770
    %1772 = vdwg.mxu0
    %v1773 = vadd.f32 %v1624, %v1711
    %v1774 = vadd.f32 %v1625, %v1731
    %v1775 = vadd.f32 %v1626, %v1751
    %v1776 = vadd.f32 %v1627, %v1771
    %v1777 = vxor.u32 %v1773, 2147483648
    %v1778 = vmul.f32 %v1777, 1.442695
    %v1779 = vpow.pop %v1778
    %v1780 = vadd.f32 %v1779, 1.0
    %v1781 = vrcp.pop %v1780
    %v1782 = vmul.f32 %v1780, %v1781
    %v1783 = vsub.f32 1.0, %v1782
    %v1784 = vmul.f32 %v1781, %v1783
    %v1785 = vadd.f32 %v1781, %v1784
    %vm1786 = vweird.f32 %v1780
    %vm1787 = vweird.f32 %v1781
    %vm1788 = vmor %vm1786, %vm1787
    %v1789 = vsel %vm1788, %v1781, %v1785
    %v1790 = vand.u32 2147483647, %v1780
    %vm1791 = vcmp.eq.f32.partialorder %v1790, 8.507059e+37
    %v1792 = vand.u32 %v1780, 2147483648
    %v1793 = vor.u32 1.1754944e-38, %v1792
    %v1794 = vsel %vm1791, %v1793, %v1789
    %v1795 = vmul.f32 1.0, %v1794
    %v1796 = vxor.u32 %v1774, 2147483648
    %v1797 = vmul.f32 %v1796, 1.442695
    %v1798 = vpow.pop %v1797
    %v1799 = vadd.f32 %v1798, 1.0
    %v1800 = vrcp.pop %v1799
    %v1801 = vmul.f32 %v1799, %v1800
    %v1802 = vsub.f32 1.0, %v1801
    %v1803 = vmul.f32 %v1800, %v1802
    %v1804 = vadd.f32 %v1800, %v1803
    %vm1805 = vweird.f32 %v1799
    %vm1806 = vweird.f32 %v1800
    %vm1807 = vmor %vm1805, %vm1806
    %v1808 = vsel %vm1807, %v1800, %v1804
    %v1809 = vand.u32 2147483647, %v1799
    %vm1810 = vcmp.eq.f32.partialorder %v1809, 8.507059e+37
    %v1811 = vand.u32 %v1799, 2147483648
    %v1812 = vor.u32 1.1754944e-38, %v1811
    %v1813 = vsel %vm1810, %v1812, %v1808
    %v1814 = vmul.f32 1.0, %v1813
    %v1815 = vtanh.pop %v1775
    %v1816 = vxor.u32 %v1776, 2147483648
    %v1817 = vmul.f32 %v1816, 1.442695
    %v1818 = vpow.pop %v1817
    %v1819 = vadd.f32 %v1818, 1.0
    %v1820 = vrcp.pop %v1819
    %v1821 = vmul.f32 %v1819, %v1820
    %v1822 = vsub.f32 1.0, %v1821
    %v1823 = vmul.f32 %v1820, %v1822
    %v1824 = vadd.f32 %v1820, %v1823
    %vm1825 = vweird.f32 %v1819
    %vm1826 = vweird.f32 %v1820
    %vm1827 = vmor %vm1825, %vm1826
    %v1828 = vsel %vm1827, %v1820, %v1824
    %v1829 = vand.u32 2147483647, %v1819
    %vm1830 = vcmp.eq.f32.partialorder %v1829, 8.507059e+37
    %v1831 = vand.u32 %v1819, 2147483648
    %v1832 = vor.u32 1.1754944e-38, %v1831
    %v1833 = vsel %vm1830, %v1832, %v1828
    %v1834 = vmul.f32 1.0, %v1833
    %v1835 = vld [vmem:[#allocation4] sm:$0xff]
    %v1836 = vmul.f32 %v1814, %v1835
    %v1837 = vmul.f32 %v1795, %v1815
    %v1838 = vadd.f32 %v1836, %v1837
    %v1839 = vtanh.pop %v1838
    %v1840 = vmul.f32 %v1834, %v1839
    %1841 = vst [vmem:[#allocation3] sm:$0xff] %v1840
    %1842 = vst [vmem:[#allocation4] sm:$0xff] %v1838
    %s1843 = scalar_lea.vmem [#allocation2], 56
    %1844 = vst [vmem:[%s1843] sm:$0xff] %v1840
    %v1845 = vld [vmem:[#allocation2] sm:$0xff]
    %v1846 = vld [vmem:[#allocation2 + $0x8] sm:$0xff]
    %v1847 = vld [vmem:[#allocation2 + $0x10] sm:$0xff]
    %v1848 = vld [vmem:[#allocation2 + $0x18] sm:$0xff]
    %v1849 = vld [vmem:[#allocation2 + $0x20] sm:$0xff]
    %v1850 = vld [vmem:[#allocation2 + $0x28] sm:$0xff]
    %v1851 = vld [vmem:[#allocation2 + $0x30] sm:$0xff]
    %v1852 = vld [vmem:[#allocation2 + $0x38] sm:$0xff]
    %v1853 = vpack.c.bf16 %v1846, %v1845
    %v1854 = vpack.c.bf16 %v1848, %v1847
    %v1855 = vpack.c.bf16 %v1850, %v1849
    %v1856 = vpack.c.bf16 %v1852, %v1851
    %v1857 = vld [vmem:[#allocation10] sm:$0xf]
    %v1858 = vld [vmem:[#allocation10 + $0x4] sm:$0xf]
    %v1859 = vld [vmem:[#allocation10 + $0x8] sm:$0xf]
    %v1860 = vld [vmem:[#allocation10 + $0xc] sm:$0xf]
    %v1861 = vld [vmem:[#allocation10 + $0x10] sm:$0xf]
    %v1862 = vld [vmem:[#allocation10 + $0x14] sm:$0xf]
    %v1863 = vld [vmem:[#allocation10 + $0x18] sm:$0xf]
    %v1864 = vld [vmem:[#allocation10 + $0x1c] sm:$0xf]
    %v1865 = vld [vmem:[#allocation10 + $0x20] sm:$0xf]
    %v1866 = vld [vmem:[#allocation10 + $0x24] sm:$0xf]
    %v1867 = vld [vmem:[#allocation10 + $0x28] sm:$0xf]
    %v1868 = vld [vmem:[#allocation10 + $0x2c] sm:$0xf]
    %v1869 = vld [vmem:[#allocation10 + $0x30] sm:$0xf]
    %v1870 = vld [vmem:[#allocation10 + $0x34] sm:$0xf]
    %v1871 = vld [vmem:[#allocation10 + $0x38] sm:$0xf]
    %v1872 = vld [vmem:[#allocation10 + $0x3c] sm:$0xf]
    %v1873 = vld [vmem:[%s3] sm:$0x1]
    %v1875 = vperm.slane %v1873, 0
    %v1893 = vunpack.c.l.b16 %v1857
    %v1894 = vunpack.c.l.b16 %v1858
    %v1895 = vunpack.c.l.b16 %v1859
    %v1896 = vunpack.c.l.b16 %v1860
    %v1897 = vunpack.c.l.b16 %v1861
    %v1898 = vunpack.c.l.b16 %v1862
    %v1899 = vunpack.c.l.b16 %v1863
    %v1900 = vunpack.c.l.b16 %v1864
    %v1901 = vunpack.c.l.b16 %v1865
    %v1902 = vunpack.c.l.b16 %v1866
    %v1903 = vunpack.c.l.b16 %v1867
    %v1904 = vunpack.c.l.b16 %v1868
    %v1905 = vunpack.c.l.b16 %v1869
    %v1906 = vunpack.c.l.b16 %v1870
    %v1907 = vunpack.c.l.b16 %v1871
    %v1908 = vunpack.c.l.b16 %v1872
    %v1909 = vpack.c.b16 %v1894, %v1893
    %v1910 = vpack.c.b16 %v1896, %v1895
    %v1911 = vpack.c.b16 %v1898, %v1897
    %v1912 = vpack.c.b16 %v1900, %v1899
    %v1913 = vpack.c.b16 %v1902, %v1901
    %v1914 = vpack.c.b16 %v1904, %v1903
    %v1915 = vpack.c.b16 %v1906, %v1905
    %v1916 = vpack.c.b16 %v1908, %v1907
    %1925 = vmatpush.bf16.msra.mxu0 %v1916
    %1926 = vmatpush.bf16.msra.mxu0 %v1915
    %1927 = vmatpush.bf16.msra.mxu0 %v1914
    %1928 = vmatpush.bf16.msra.mxu0 %v1913
    %1929 = vmatpush.bf16.msra.mxu0 %v1912
    %1930 = vmatpush.bf16.msra.mxu0 %v1911
    %1931 = vmatpush.bf16.msra.mxu0 %v1910
    %1932 = vmatpush.bf16.msra.mxu0 %v1909
    %1933 = vmatmul.bf16.gmra.mxu0 %v1853
    %v1934 = vpop.f32.mrf.mxu0
    %v1935 = vadd.f32 %v1875, %v1934
    %v1936 = vpop.f32.mrf.mxu0
    %v1937 = vadd.f32 %v1875, %v1936
    %1938 = vmatmul.bf16.gmra.mxu0 %v1854
    %v1939 = vpop.f32.mrf.mxu0
    %v1940 = vadd.f32 %v1875, %v1939
    %v1941 = vpop.f32.mrf.mxu0
    %v1942 = vadd.f32 %v1875, %v1941
    %1943 = vmatmul.bf16.gmra.mxu0 %v1855
    %v1944 = vpop.f32.mrf.mxu0
    %v1945 = vadd.f32 %v1875, %v1944
    %v1946 = vpop.f32.mrf.mxu0
    %v1947 = vadd.f32 %v1875, %v1946
    %1948 = vmatmul.bf16.gmra.mxu0 %v1856
    %v1949 = vpop.f32.mrf.mxu0
    %v1950 = vadd.f32 %v1875, %v1949
    %v1951 = vpop.f32.mrf.mxu0
    %v1952 = vadd.f32 %v1875, %v1951
    %1953 = vdwg.mxu0
    %1954 = vst [vmem:[#allocation11] sm:$0xff] %v1935
    %1955 = vst [vmem:[#allocation11 + $0x8] sm:$0xff] %v1937
    %1956 = vst [vmem:[#allocation11 + $0x10] sm:$0xff] %v1940
    %1957 = vst [vmem:[#allocation11 + $0x18] sm:$0xff] %v1942
    %1958 = vst [vmem:[#allocation11 + $0x20] sm:$0xff] %v1945
    %1959 = vst [vmem:[#allocation11 + $0x28] sm:$0xff] %v1947
    %1960 = vst [vmem:[#allocation11 + $0x30] sm:$0xff] %v1950
    %1961 = vst [vmem:[#allocation11 + $0x38] sm:$0xff] %v1952
    // Predicated region
    $region34: #{tpu_custom_call.1} parent=1 // pred_check
      _
    $region35: #{tpu_custom_call.1} parent=1 // pred_check_branch
      %1963 = sbr.rel (0) target = $region37
    $region36: #{tpu_custom_call.1} parent=1 // pred_region
      %1965 = vsyncadd [#allocation7], 0
      %s1966 = sshll.u32 [#allocation11], 4
      %s1967 = int_to_ptr.vmem [resolvable:$true] %s1966
      %s1968 = sshll.u32 %s4, 4
      %s1969 = int_to_ptr.hbm [resolvable:$true] %s1968
      %1974 = dma.vmem_to_hbm [thread:$0]  %s1967, 1024, %s1969, [#allocation7], 128, 128, 8
    $region37: #{tpu_custom_call.1} parent=1 // pred_fallthru
      _
    // Predicated region
    $region38: #{tpu_custom_call.1} parent=1 // pred_check
      _
    $region39: #{tpu_custom_call.1} parent=1 // pred_check_branch
      %1976 = sbr.rel (0) target = $region41
    $region40: #{tpu_custom_call.1} parent=1 // pred_region
      %1978 = dma.done [#allocation7], 1024
    $region41: #{tpu_custom_call.1} parent=1 // pred_fallthru
      _
    %1979 = vsyncpa [#allocation6], 1
    %1980 = vsyncpa [#allocation9], 1
    %1981 = vsyncpa [#allocation7], 1

</llo_original>
